<compile_context>
chip_gen: v6e
topology: v6e:2x2x1
jax: 0.10.0
libtpu: 0.0.40
codegen_flags: <defaults>
</compile_context>

<pallas_src>
import functools

import jax
import jax.numpy as jnp
from jax.experimental import pallas as pl
from jax.experimental.pallas import tpu as pltpu


# --------------------------------------------------------------------------- #
# kernel
# --------------------------------------------------------------------------- #
def _layernorm_f32(h, w, b, eps=1e-5):
    # h: (L, D) f32, w/b: (D,) f32 — matches torch LayerNorm (fp32 math, like the
    # LayerNorm subclass in the module).
    mu = jnp.mean(h, axis=-1, keepdims=True)
    var = jnp.mean((h - mu) * (h - mu), axis=-1, keepdims=True)
    return (h - mu) * jax.lax.rsqrt(var + eps) * w + b


def _block_kernel(*refs, n_head: int, ffn_chunks: int, has_mask: bool,
                  compute_dtype):
    if has_mask:
        (x_ref, mask_ref,
         ln1w_ref, ln1b_ref, wqkv_ref, bqkv_ref, wo_ref, bo_ref,
         ln2w_ref, ln2b_ref, wfc_ref, bfc_ref, wproj_ref, bproj_ref,
         o_ref) = refs
    else:
        (x_ref,
         ln1w_ref, ln1b_ref, wqkv_ref, bqkv_ref, wo_ref, bo_ref,
         ln2w_ref, ln2b_ref, wfc_ref, bfc_ref, wproj_ref, bproj_ref,
         o_ref) = refs
        mask_ref = None

    cdt = compute_dtype
    x = x_ref[...].astype(jnp.float32)                      # (L, D)
    L, D = x.shape
    H = n_head
    hd = D // H

    # ------------------------- attention branch ------------------------- #
    h = _layernorm_f32(x, ln1w_ref[0, :], ln1b_ref[0, :])   # (L, D) f32

    # in_proj (weights pre-transposed to (D, 3D); scale folded into Q rows)
    qkv = jnp.dot(h.astype(cdt), wqkv_ref[...],
                  preferred_element_type=jnp.float32) + bqkv_ref[0, :]   # (L, 3D)

    def split_heads(t):                                     # (L, D) -> (H, L, hd)
        return jnp.swapaxes(t.astype(cdt).reshape(L, H, hd), 0, 1)

    q = split_heads(qkv[:, 0 * D:1 * D])
    k = split_heads(qkv[:, 1 * D:2 * D])
    v = split_heads(qkv[:, 2 * D:3 * D])

    # batched-head scores (Q already carries 1/sqrt(hd))
    s = jnp.einsum('hqd,hkd->hqk', q, k,
                   preferred_element_type=jnp.float32)      # (H, L, L) f32
    if has_mask:
        s = s + mask_ref[...].astype(jnp.float32)[None, :, :]

    m = jnp.max(s, axis=-1, keepdims=True)
    p = jnp.exp(s - m)                                      # unnormalized probs (f32)
    l = jnp.sum(p, axis=-1, keepdims=True)                  # (H, L, 1)

    o = jnp.einsum('hqk,hkd->hqd', p.astype(cdt), v,
                   preferred_element_type=jnp.float32)      # (H, L, hd) f32
    o = o * pl.reciprocal(l, approx=True)                   # deferred softmax norm (EUP)

    attn = jnp.swapaxes(o, 0, 1).reshape(L, D)              # (L, D) f32
    attn = jnp.dot(attn.astype(cdt), wo_ref[...],
                   preferred_element_type=jnp.float32) + bo_ref[0, :]

    x = x + attn                                            # residual 1 (f32)

    # ---------------------------- MLP branch ---------------------------- #
    h2 = _layernorm_f32(x, ln2w_ref[0, :], ln2b_ref[0, :]).astype(cdt)   # (L, D)
    d_ff = wfc_ref.shape[1]
    chunk = d_ff // ffn_chunks

    ff = None
    for c in range(ffn_chunks):                             # static, small trip count
        lo = c * chunk
        hid = jnp.dot(h2, wfc_ref[:, lo:lo + chunk],
                      preferred_element_type=jnp.float32) + bfc_ref[0, lo:lo + chunk]
        hid = hid * jax.nn.sigmoid(1.702 * hid)             # QuickGELU (f32)
        contrib = jnp.dot(hid.astype(cdt), wproj_ref[lo:lo + chunk, :],
                          preferred_element_type=jnp.float32)
        ff = contrib if ff is None else ff + contrib
    ff = ff + bproj_ref[0, :]

    o_ref[...] = (x + ff).astype(o_ref.dtype)               # residual 2


# --------------------------------------------------------------------------- #
# wrapper
# --------------------------------------------------------------------------- #
def _prepare_params(params, n_head, compute_dtype):
    """Pre-transpose weights to (in, out), fold 1/sqrt(hd) into Q, cast to bf16."""
    D = params["ln1_w"].shape[-1]
    hd = D // n_head
    scale = 1.0 / (hd ** 0.5)
    qscale = jnp.concatenate([jnp.full((D,), scale, jnp.float32),
                              jnp.ones((2 * D,), jnp.float32)])

    w_qkv = params["w_qkv"].astype(jnp.float32) * qscale[:, None]        # (3D, D)
    b_qkv = params["b_qkv"].reshape(1, 3 * D).astype(jnp.float32) * qscale[None, :]

    return dict(
        ln1_w=params["ln1_w"].reshape(1, D).astype(jnp.float32),
        ln1_b=params["ln1_b"].reshape(1, D).astype(jnp.float32),
        w_qkv=w_qkv.T.astype(compute_dtype),                             # (D, 3D)
        b_qkv=b_qkv,                                                     # (1, 3D) f32
        w_o=params["w_o"].T.astype(compute_dtype),                       # (D, D)
        b_o=params["b_o"].reshape(1, D).astype(jnp.float32),
        ln2_w=params["ln2_w"].reshape(1, D).astype(jnp.float32),
        ln2_b=params["ln2_b"].reshape(1, D).astype(jnp.float32),
        w_fc=params["w_fc"].T.astype(compute_dtype),                     # (D, 4D)
        b_fc=params["b_fc"].reshape(1, 4 * D).astype(jnp.float32),
        w_proj=params["w_proj"].T.astype(compute_dtype),                 # (4D, D)
        b_proj=params["b_proj"].reshape(1, D).astype(jnp.float32),
    )


def _vmem_capacity_bytes():
    try:
        return int(pltpu.get_tpu_info().vmem_capacity_bytes)
    except Exception:
        return 64 * 1024 * 1024          # conservative (v7x per-TC)


def residual_attention_block(x, params, *, n_head: int, attn_mask=None,
                             compute_dtype=jnp.bfloat16, batch_first=False):
    """Forward pass of ResidualAttentionBlock.

    x: (L, N, D) seq-first (PyTorch nn.MultiheadAttention convention) unless
       batch_first=True, in which case x is (N, L, D) and no transposes are issued.
    attn_mask: optional additive (L, L) mask (e.g. causal), as in the module.
    """
    if batch_first:
        xb = x
        N, L, D = x.shape
    else:
        L, N, D = x.shape
        xb = jnp.transpose(x, (1, 0, 2))                    # (N, L, D)
    assert D % n_head == 0, "d_model must be divisible by n_head"

    prep = _prepare_params(params, n_head, compute_dtype)
    param_order = ("ln1_w", "ln1_b", "w_qkv", "b_qkv", "w_o", "b_o",
                   "ln2_w", "ln2_b", "w_fc", "b_fc", "w_proj", "b_proj")
    param_arrays = [prep[k] for k in param_order]

    # FFN hidden chunking to bound the (L, 4D) f32 intermediate.
    d_ff = 4 * D
    chunk = d_ff
    while chunk > 2048 and chunk % 2 == 0:
        chunk //= 2
    ffn_chunks = d_ff // chunk

    has_mask = attn_mask is not None
    operands = [xb]
    in_specs = [pl.BlockSpec((pl.Squeezed(), L, D), lambda b: (b, 0, 0))]
    if has_mask:
        mask = attn_mask.astype(jnp.float32)
        operands.append(mask)
        in_specs.append(pl.BlockSpec((L, L), lambda b: (0, 0)))
    operands.extend(param_arrays)
    # Constant index_maps -> weights fetched once and stay VMEM-resident over the grid.
    in_specs.extend(pl.BlockSpec(p.shape, lambda b: (0, 0)) for p in param_arrays)

    # --- VMEM budget: weights (x2 buffering) + activations + f32 intermediates ---
    bytes_weights = sum(int(a.size) * a.dtype.itemsize for a in param_arrays)
    bytes_x_blk = L * D * x.dtype.itemsize
    bytes_mask = (L * L * 4) if has_mask else 0
    bytes_scratch = 4 * (3 * n_head * L * L            # scores / probs
                         + 6 * L * D                   # qkv / residual / attn temps
                         + L * chunk)                  # ffn hidden chunk
    need = 2 * bytes_weights + 2 * bytes_mask + 4 * bytes_x_blk + bytes_scratch
    vmem_limit = int(min(0.9 * _vmem_capacity_bytes(),
                         max(32 * 1024 * 1024, 2 * need)))

    out = pl.pallas_call(
        functools.partial(_block_kernel, n_head=n_head, ffn_chunks=ffn_chunks,
                          has_mask=has_mask, compute_dtype=compute_dtype),
        out_shape=jax.ShapeDtypeStruct((N, L, D), x.dtype),
        grid=(N,),
        in_specs=in_specs,
        out_specs=pl.BlockSpec((pl.Squeezed(), L, D), lambda b: (b, 0, 0)),
        compiler_params=pltpu.CompilerParams(
            dimension_semantics=("parallel",),
            vmem_limit_bytes=vmem_limit),
    )(*operands)

    if batch_first:
        return out
    return jnp.transpose(out, (1, 0, 2))                    # back to (L, N, D)


# --------------------------------------------------------------------------- #
# pure-JAX reference (for correctness check)
# --------------------------------------------------------------------------- #
def _reference(x, p, n_head, attn_mask=None):
    L, N, D = x.shape
    hd = D // n_head

    def ln(h, w, b):
        h32 = h.astype(jnp.float32)
        mu = jnp.mean(h32, -1, keepdims=True)
        var = jnp.mean((h32 - mu) ** 2, -1, keepdims=True)
        return ((h32 - mu) / jnp.sqrt(var + 1e-5) * w + b).astype(x.dtype)

    h = ln(x, p["ln1_w"][0], p["ln1_b"][0])                         # (L, N, D)
    qkv = jnp.einsum("lnd,ed->lne", h, p["w_qkv"]) + p["b_qkv"][0]
    q, k, v = jnp.split(qkv, 3, axis=-1)

    def split_heads(t):  # (L, N, D) -> (N, H, L, hd)
        return t.reshape(L, N, n_head, hd).transpose(1, 2, 0, 3)

    qh, kh, vh = split_heads(q), split_heads(k), split_heads(v)
    s = jnp.einsum("nhqd,nhkd->nhqk", qh, kh) / (hd ** 0.5)
    if attn_mask is not None:
        s = s + attn_mask[None, None]
    pattn = jax.nn.softmax(s, axis=-1)
    ao = jnp.einsum("nhqk,nhkd->nhqd", pattn, vh)
    ao = ao.transpose(2, 0, 1, 3).reshape(L, N, D)
    ao = jnp.einsum("lnd,ed->lne", ao, p["w_o"]) + p["b_o"][0]
    x = x + ao

    h2 = ln(x, p["ln2_w"][0], p["ln2_b"][0])
    ff = jnp.einsum("lnd,ed->lne", h2, p["w_fc"]) + p["b_fc"][0]
    ff = ff * jax.nn.sigmoid(1.702 * ff)
    ff = jnp.einsum("lne,de->lnd", ff, p["w_proj"]) + p["b_proj"][0]
    return x + ff


def make_params(key, d_model):
    ks = jax.random.split(key, 8)
    scale = 0.05
    return {
        "ln1_w": jnp.ones((1, d_model), jnp.float32),
        "ln1_b": jnp.zeros((1, d_model), jnp.float32),
        "w_qkv": scale * jax.random.normal(ks[0], (3 * d_model, d_model), jnp.float32),
        "b_qkv": scale * jax.random.normal(ks[1], (1, 3 * d_model), jnp.float32),
        "w_o": scale * jax.random.normal(ks[2], (d_model, d_model), jnp.float32),
        "b_o": scale * jax.random.normal(ks[3], (1, d_model), jnp.float32),
        "ln2_w": jnp.ones((1, d_model), jnp.float32),
        "ln2_b": jnp.zeros((1, d_model), jnp.float32),
        "w_fc": scale * jax.random.normal(ks[4], (4 * d_model, d_model), jnp.float32),
        "b_fc": scale * jax.random.normal(ks[5], (1, 4 * d_model), jnp.float32),
        "w_proj": scale * jax.random.normal(ks[6], (d_model, 4 * d_model), jnp.float32),
        "b_proj": scale * jax.random.normal(ks[7], (1, d_model), jnp.float32),
    }


if __name__ == "__main__":
    # small shapes: seq=8, batch=2, d_model=32, n_head=4 (head_dim=8)
    L, N, D, H = 8, 2, 32, 4
    key = jax.random.PRNGKey(0)
    kx, kp = jax.random.split(key)
    x = jax.random.normal(kx, (L, N, D), jnp.float32)
    params = make_params(kp, D)

    ref = _reference(x, params, H)

    # (1) fp32 compute path — tight functional check against the reference
    out32 = residual_attention_block(x, params, n_head=H,
                                     compute_dtype=jnp.float32)
    out32 = jax.block_until_ready(out32)
    assert out32.shape == (L, N, D) and out32.dtype == x.dtype
    err32 = float(jnp.max(jnp.abs(out32 - ref)))
    assert err32 < 2e-3, err32

    # (2) optimized bf16-MXU path (default) — looser tolerance
    out_bf = residual_attention_block(x, params, n_head=H)
    out_bf = jax.block_until_ready(out_bf)
    err_bf = float(jnp.max(jnp.abs(out_bf - ref)))
    assert err_bf < 2e-2, err_bf

    # (3) masked (causal) path, like the CLIP text tower
    mask = jnp.triu(jnp.full((L, L), -1e9, jnp.float32), k=1)
    out_m = residual_attention_block(x, params, n_head=H, attn_mask=mask)
    out_m = jax.block_until_ready(out_m)
    ref_m = _reference(x, params, H, attn_mask=mask)
    err_m = float(jnp.max(jnp.abs(out_m - ref_m)))
    assert err_m < 2e-2, err_m

    print("KERNEL_OK")
</pallas_src>

<mosaic_0001>
module attributes {stable_mosaic.version = 11 : i64} {
  func.func @_block_kernel(%arg0: i32, %arg1: memref<1x8x32xf32, #tpu.memory_space<vmem>>, %arg2: memref<1x32xf32, #tpu.memory_space<vmem>>, %arg3: memref<1x32xf32, #tpu.memory_space<vmem>>, %arg4: memref<32x96xf32, #tpu.memory_space<vmem>>, %arg5: memref<1x96xf32, #tpu.memory_space<vmem>>, %arg6: memref<32x32xf32, #tpu.memory_space<vmem>>, %arg7: memref<1x32xf32, #tpu.memory_space<vmem>>, %arg8: memref<1x32xf32, #tpu.memory_space<vmem>>, %arg9: memref<1x32xf32, #tpu.memory_space<vmem>>, %arg10: memref<32x128xf32, #tpu.memory_space<vmem>>, %arg11: memref<1x128xf32, #tpu.memory_space<vmem>>, %arg12: memref<128x32xf32, #tpu.memory_space<vmem>>, %arg13: memref<1x32xf32, #tpu.memory_space<vmem>>, %arg14: memref<1x8x32xf32, #tpu.memory_space<vmem>>) attributes {dimension_semantics = [#tpu.dimension_semantics<parallel>], iteration_bounds = array<i64: 2>, scalar_prefetch = 0 : i64, scratch_operands = 0 : i64, tpu.core_type = #tpu.core_type<tc>, window_params = [{transform_indices = @transform_0, window_bounds = array<i64: 1, 8, 32>}, {pipeline_mode = #tpu.pipeline_mode<synchronous>, transform_indices = @transform_1, window_bounds = array<i64: 1, 32>}, {pipeline_mode = #tpu.pipeline_mode<synchronous>, transform_indices = @transform_2, window_bounds = array<i64: 1, 32>}, {pipeline_mode = #tpu.pipeline_mode<synchronous>, transform_indices = @transform_3, window_bounds = array<i64: 32, 96>}, {pipeline_mode = #tpu.pipeline_mode<synchronous>, transform_indices = @transform_4, window_bounds = array<i64: 1, 96>}, {pipeline_mode = #tpu.pipeline_mode<synchronous>, transform_indices = @transform_5, window_bounds = array<i64: 32, 32>}, {pipeline_mode = #tpu.pipeline_mode<synchronous>, transform_indices = @transform_6, window_bounds = array<i64: 1, 32>}, {pipeline_mode = #tpu.pipeline_mode<synchronous>, transform_indices = @transform_7, window_bounds = array<i64: 1, 32>}, {pipeline_mode = #tpu.pipeline_mode<synchronous>, transform_indices = @transform_8, window_bounds = array<i64: 1, 32>}, {pipeline_mode = #tpu.pipeline_mode<synchronous>, transform_indices = @transform_9, window_bounds = array<i64: 32, 128>}, {pipeline_mode = #tpu.pipeline_mode<synchronous>, transform_indices = @transform_10, window_bounds = array<i64: 1, 128>}, {pipeline_mode = #tpu.pipeline_mode<synchronous>, transform_indices = @transform_11, window_bounds = array<i64: 128, 32>}, {pipeline_mode = #tpu.pipeline_mode<synchronous>, transform_indices = @transform_12, window_bounds = array<i64: 1, 32>}, {transform_indices = @transform_13, window_bounds = array<i64: 1, 8, 32>}]} {
    %c0 = arith.constant 0 : index
    %c0_0 = arith.constant 0 : index
    %c0_1 = arith.constant 0 : index
    %0 = vector.load %arg1[%c0, %c0_0, %c0_1] : memref<1x8x32xf32, #tpu.memory_space<vmem>>, vector<1x8x32xf32>
    %1 = vector.shape_cast %0 : vector<1x8x32xf32> to vector<8x32xf32>
    %c0_2 = arith.constant 0 : index
    %c0_3 = arith.constant 0 : index
    %2 = vector.load %arg2[%c0_2, %c0_3] : memref<1x32xf32, #tpu.memory_space<vmem>>, vector<1x32xf32>
    %3 = vector.shape_cast %2 : vector<1x32xf32> to vector<32xf32>
    %c0_4 = arith.constant 0 : index
    %c0_5 = arith.constant 0 : index
    %4 = vector.load %arg3[%c0_4, %c0_5] : memref<1x32xf32, #tpu.memory_space<vmem>>, vector<1x32xf32>
    %5 = vector.shape_cast %4 : vector<1x32xf32> to vector<32xf32>
    %cst = arith.constant dense<0.000000e+00> : vector<8xf32>
    %6 = vector.multi_reduction <add>, %1, %cst [1] : vector<8x32xf32> to vector<8xf32>
    %7 = vector.shape_cast %6 : vector<8xf32> to vector<8x1xf32>
    %cst_6 = arith.constant 3.200000e+01 : f32
    %8 = vector.broadcast %cst_6 : f32 to vector<8x1xf32>
    %9 = arith.divf %7, %8 : vector<8x1xf32>
    %10 = vector.broadcast %9 : vector<8x1xf32> to vector<8x32xf32>
    %11 = arith.subf %1, %10 : vector<8x32xf32>
    %12 = vector.broadcast %9 : vector<8x1xf32> to vector<8x32xf32>
    %13 = arith.subf %1, %12 : vector<8x32xf32>
    %14 = arith.mulf %11, %13 : vector<8x32xf32>
    %cst_7 = arith.constant dense<0.000000e+00> : vector<8xf32>
    %15 = vector.multi_reduction <add>, %14, %cst_7 [1] : vector<8x32xf32> to vector<8xf32>
    %16 = vector.shape_cast %15 : vector<8xf32> to vector<8x1xf32>
    %cst_8 = arith.constant 3.200000e+01 : f32
    %17 = vector.broadcast %cst_8 : f32 to vector<8x1xf32>
    %18 = arith.divf %16, %17 : vector<8x1xf32>
    %19 = vector.broadcast %9 : vector<8x1xf32> to vector<8x32xf32>
    %20 = arith.subf %1, %19 : vector<8x32xf32>
    %cst_9 = arith.constant 9.99999974E-6 : f32
    %21 = vector.broadcast %cst_9 : f32 to vector<8x1xf32>
    %22 = arith.addf %18, %21 : vector<8x1xf32>
    %23 = math.rsqrt %22 : vector<8x1xf32>
    %24 = vector.broadcast %23 : vector<8x1xf32> to vector<8x32xf32>
    %25 = arith.mulf %20, %24 : vector<8x32xf32>
    %26 = vector.shape_cast %3 : vector<32xf32> to vector<1x32xf32>
    %27 = vector.broadcast %26 : vector<1x32xf32> to vector<8x32xf32>
    %28 = arith.mulf %25, %27 : vector<8x32xf32>
    %29 = vector.shape_cast %5 : vector<32xf32> to vector<1x32xf32>
    %30 = vector.broadcast %29 : vector<1x32xf32> to vector<8x32xf32>
    %31 = arith.addf %28, %30 : vector<8x32xf32>
    %c0_10 = arith.constant 0 : index
    %c0_11 = arith.constant 0 : index
    %32 = vector.load %arg4[%c0_10, %c0_11] : memref<32x96xf32, #tpu.memory_space<vmem>>, vector<32x96xf32>
    %cst_12 = arith.constant dense<0.000000e+00> : vector<8x96xf32>
    %33 = tpu.matmul %31, %32, %cst_12 {dimension_numbers = #tpu.dot_dimension_numbers<[1], [0], [0], [1], [0, 0, 1, 1], [], []>} : vector<8x32xf32>, vector<32x96xf32>, vector<8x96xf32> -> vector<8x96xf32>
    %c0_13 = arith.constant 0 : index
    %c0_14 = arith.constant 0 : index
    %34 = vector.load %arg5[%c0_13, %c0_14] : memref<1x96xf32, #tpu.memory_space<vmem>>, vector<1x96xf32>
    %35 = vector.shape_cast %34 : vector<1x96xf32> to vector<96xf32>
    %36 = vector.shape_cast %35 : vector<96xf32> to vector<1x96xf32>
    %37 = vector.broadcast %36 : vector<1x96xf32> to vector<8x96xf32>
    %38 = arith.addf %33, %37 : vector<8x96xf32>
    %39 = vector.extract_strided_slice %38 {offsets = [0, 0], sizes = [8, 32], strides = [1, 1]} : vector<8x96xf32> to vector<8x32xf32>
    %40 = vector.shape_cast %39 : vector<8x32xf32> to vector<8x4x8xf32>
    %41 = tpu.transpose %40, [1, 0, 2] : vector<8x4x8xf32> -> vector<4x8x8xf32>
    %42 = vector.extract_strided_slice %38 {offsets = [0, 32], sizes = [8, 32], strides = [1, 1]} : vector<8x96xf32> to vector<8x32xf32>
    %43 = vector.shape_cast %42 : vector<8x32xf32> to vector<8x4x8xf32>
    %44 = tpu.transpose %43, [1, 0, 2] : vector<8x4x8xf32> -> vector<4x8x8xf32>
    %45 = vector.extract_strided_slice %38 {offsets = [0, 64], sizes = [8, 32], strides = [1, 1]} : vector<8x96xf32> to vector<8x32xf32>
    %46 = vector.shape_cast %45 : vector<8x32xf32> to vector<8x4x8xf32>
    %47 = tpu.transpose %46, [1, 0, 2] : vector<8x4x8xf32> -> vector<4x8x8xf32>
    "tpu.trace_start"() <{level = 10 : i32, message = "hqd,hkd->hqk"}> : () -> ()
    %cst_15 = arith.constant dense<0.000000e+00> : vector<4x8x8xf32>
    %48 = tpu.matmul %41, %44, %cst_15 {dimension_numbers = #tpu.dot_dimension_numbers<[2], [2], [1], [1], [0, 0, 0, 1, 1, 1], [0], [0]>} : vector<4x8x8xf32>, vector<4x8x8xf32>, vector<4x8x8xf32> -> vector<4x8x8xf32>
    "tpu.trace_stop"() : () -> ()
    %cst_16 = arith.constant dense<0xFF800000> : vector<4x8xf32>
    %49 = vector.multi_reduction <maximumf>, %48, %cst_16 [2] : vector<4x8x8xf32> to vector<4x8xf32>
    %50 = vector.shape_cast %49 : vector<4x8xf32> to vector<4x8x1xf32>
    %51 = vector.broadcast %50 : vector<4x8x1xf32> to vector<4x8x8xf32>
    %52 = arith.subf %48, %51 : vector<4x8x8xf32>
    %53 = math.exp %52 : vector<4x8x8xf32>
    %cst_17 = arith.constant dense<0.000000e+00> : vector<4x8xf32>
    %54 = vector.multi_reduction <add>, %53, %cst_17 [2] : vector<4x8x8xf32> to vector<4x8xf32>
    %55 = vector.shape_cast %54 : vector<4x8xf32> to vector<4x8x1xf32>
    "tpu.trace_start"() <{level = 10 : i32, message = "hqk,hkd->hqd"}> : () -> ()
    %cst_18 = arith.constant dense<0.000000e+00> : vector<4x8x8xf32>
    %56 = tpu.matmul %53, %47, %cst_18 {dimension_numbers = #tpu.dot_dimension_numbers<[2], [1], [1], [2], [0, 0, 0, 1, 1, 2], [0], [0]>} : vector<4x8x8xf32>, vector<4x8x8xf32>, vector<4x8x8xf32> -> vector<4x8x8xf32>
    "tpu.trace_stop"() : () -> ()
    %57 = tpu.reciprocal %55 {approx = true} : vector<4x8x1xf32> -> vector<4x8x1xf32>
    %58 = vector.broadcast %57 : vector<4x8x1xf32> to vector<4x8x8xf32>
    %59 = arith.mulf %56, %58 : vector<4x8x8xf32>
    %60 = tpu.transpose %59, [1, 0, 2] : vector<4x8x8xf32> -> vector<8x4x8xf32>
    %61 = vector.shape_cast %60 : vector<8x4x8xf32> to vector<8x32xf32>
    %c0_19 = arith.constant 0 : index
    %c0_20 = arith.constant 0 : index
    %62 = vector.load %arg6[%c0_19, %c0_20] : memref<32x32xf32, #tpu.memory_space<vmem>>, vector<32x32xf32>
    %cst_21 = arith.constant dense<0.000000e+00> : vector<8x32xf32>
    %63 = tpu.matmul %61, %62, %cst_21 {dimension_numbers = #tpu.dot_dimension_numbers<[1], [0], [0], [1], [0, 0, 1, 1], [], []>} : vector<8x32xf32>, vector<32x32xf32>, vector<8x32xf32> -> vector<8x32xf32>
    %c0_22 = arith.constant 0 : index
    %c0_23 = arith.constant 0 : index
    %64 = vector.load %arg7[%c0_22, %c0_23] : memref<1x32xf32, #tpu.memory_space<vmem>>, vector<1x32xf32>
    %65 = vector.shape_cast %64 : vector<1x32xf32> to vector<32xf32>
    %66 = vector.shape_cast %65 : vector<32xf32> to vector<1x32xf32>
    %67 = vector.broadcast %66 : vector<1x32xf32> to vector<8x32xf32>
    %68 = arith.addf %63, %67 : vector<8x32xf32>
    %69 = arith.addf %1, %68 : vector<8x32xf32>
    %c0_24 = arith.constant 0 : index
    %c0_25 = arith.constant 0 : index
    %70 = vector.load %arg8[%c0_24, %c0_25] : memref<1x32xf32, #tpu.memory_space<vmem>>, vector<1x32xf32>
    %71 = vector.shape_cast %70 : vector<1x32xf32> to vector<32xf32>
    %c0_26 = arith.constant 0 : index
    %c0_27 = arith.constant 0 : index
    %72 = vector.load %arg9[%c0_26, %c0_27] : memref<1x32xf32, #tpu.memory_space<vmem>>, vector<1x32xf32>
    %73 = vector.shape_cast %72 : vector<1x32xf32> to vector<32xf32>
    %cst_28 = arith.constant dense<0.000000e+00> : vector<8xf32>
    %74 = vector.multi_reduction <add>, %69, %cst_28 [1] : vector<8x32xf32> to vector<8xf32>
    %75 = vector.shape_cast %74 : vector<8xf32> to vector<8x1xf32>
    %cst_29 = arith.constant 3.200000e+01 : f32
    %76 = vector.broadcast %cst_29 : f32 to vector<8x1xf32>
    %77 = arith.divf %75, %76 : vector<8x1xf32>
    %78 = vector.broadcast %77 : vector<8x1xf32> to vector<8x32xf32>
    %79 = arith.subf %69, %78 : vector<8x32xf32>
    %80 = vector.broadcast %77 : vector<8x1xf32> to vector<8x32xf32>
    %81 = arith.subf %69, %80 : vector<8x32xf32>
    %82 = arith.mulf %79, %81 : vector<8x32xf32>
    %cst_30 = arith.constant dense<0.000000e+00> : vector<8xf32>
    %83 = vector.multi_reduction <add>, %82, %cst_30 [1] : vector<8x32xf32> to vector<8xf32>
    %84 = vector.shape_cast %83 : vector<8xf32> to vector<8x1xf32>
    %cst_31 = arith.constant 3.200000e+01 : f32
    %85 = vector.broadcast %cst_31 : f32 to vector<8x1xf32>
    %86 = arith.divf %84, %85 : vector<8x1xf32>
    %87 = vector.broadcast %77 : vector<8x1xf32> to vector<8x32xf32>
    %88 = arith.subf %69, %87 : vector<8x32xf32>
    %cst_32 = arith.constant 9.99999974E-6 : f32
    %89 = vector.broadcast %cst_32 : f32 to vector<8x1xf32>
    %90 = arith.addf %86, %89 : vector<8x1xf32>
    %91 = math.rsqrt %90 : vector<8x1xf32>
    %92 = vector.broadcast %91 : vector<8x1xf32> to vector<8x32xf32>
    %93 = arith.mulf %88, %92 : vector<8x32xf32>
    %94 = vector.shape_cast %71 : vector<32xf32> to vector<1x32xf32>
    %95 = vector.broadcast %94 : vector<1x32xf32> to vector<8x32xf32>
    %96 = arith.mulf %93, %95 : vector<8x32xf32>
    %97 = vector.shape_cast %73 : vector<32xf32> to vector<1x32xf32>
    %98 = vector.broadcast %97 : vector<1x32xf32> to vector<8x32xf32>
    %99 = arith.addf %96, %98 : vector<8x32xf32>
    %c0_33 = arith.constant 0 : index
    %c0_34 = arith.constant 0 : index
    %100 = vector.load %arg10[%c0_33, %c0_34] : memref<32x128xf32, #tpu.memory_space<vmem>>, vector<32x128xf32>
    %cst_35 = arith.constant dense<0.000000e+00> : vector<8x128xf32>
    %101 = tpu.matmul %99, %100, %cst_35 {dimension_numbers = #tpu.dot_dimension_numbers<[1], [0], [0], [1], [0, 0, 1, 1], [], []>} : vector<8x32xf32>, vector<32x128xf32>, vector<8x128xf32> -> vector<8x128xf32>
    %c0_36 = arith.constant 0 : index
    %c0_37 = arith.constant 0 : index
    %102 = vector.load %arg11[%c0_36, %c0_37] : memref<1x128xf32, #tpu.memory_space<vmem>>, vector<1x128xf32>
    %103 = vector.shape_cast %102 : vector<1x128xf32> to vector<128xf32>
    %104 = vector.shape_cast %103 : vector<128xf32> to vector<1x128xf32>
    %105 = vector.broadcast %104 : vector<1x128xf32> to vector<8x128xf32>
    %106 = arith.addf %101, %105 : vector<8x128xf32>
    %cst_38 = arith.constant 1.702000e+00 : f32
    %107 = vector.broadcast %cst_38 : f32 to vector<8x128xf32>
    %108 = arith.mulf %107, %106 : vector<8x128xf32>
    %109 = arith.negf %108 : vector<8x128xf32>
    %110 = math.exp %109 : vector<8x128xf32>
    %cst_39 = arith.constant 1.000000e+00 : f32
    %111 = vector.broadcast %cst_39 : f32 to vector<8x128xf32>
    %112 = arith.addf %111, %110 : vector<8x128xf32>
    %113 = arith.divf %111, %112 : vector<8x128xf32>
    %114 = arith.mulf %106, %113 : vector<8x128xf32>
    %c0_40 = arith.constant 0 : index
    %c0_41 = arith.constant 0 : index
    %115 = vector.load %arg12[%c0_40, %c0_41] : memref<128x32xf32, #tpu.memory_space<vmem>>, vector<128x32xf32>
    %cst_42 = arith.constant dense<0.000000e+00> : vector<8x32xf32>
    %116 = tpu.matmul %114, %115, %cst_42 {dimension_numbers = #tpu.dot_dimension_numbers<[1], [0], [0], [1], [0, 0, 1, 1], [], []>} : vector<8x128xf32>, vector<128x32xf32>, vector<8x32xf32> -> vector<8x32xf32>
    %c0_43 = arith.constant 0 : index
    %c0_44 = arith.constant 0 : index
    %117 = vector.load %arg13[%c0_43, %c0_44] : memref<1x32xf32, #tpu.memory_space<vmem>>, vector<1x32xf32>
    %118 = vector.shape_cast %117 : vector<1x32xf32> to vector<32xf32>
    %119 = vector.shape_cast %118 : vector<32xf32> to vector<1x32xf32>
    %120 = vector.broadcast %119 : vector<1x32xf32> to vector<8x32xf32>
    %121 = arith.addf %116, %120 : vector<8x32xf32>
    %122 = arith.addf %69, %121 : vector<8x32xf32>
    %c0_45 = arith.constant 0 : index
    %c0_46 = arith.constant 0 : index
    %c0_47 = arith.constant 0 : index
    %123 = vector.load %arg14[%c0_45, %c0_46, %c0_47] : memref<1x8x32xf32, #tpu.memory_space<vmem>>, vector<1x8x32xf32>
    %124 = vector.shape_cast %123 : vector<1x8x32xf32> to vector<8x32xf32>
    %125 = vector.shape_cast %122 : vector<8x32xf32> to vector<1x8x32xf32>
    tpu.vector_store %arg14[%c0_45, %c0_46, %c0_47], %125 {strides = array<i32>} : memref<1x8x32xf32, #tpu.memory_space<vmem>>, vector<1x8x32xf32>,
    return
  }
  func.func @transform_0(%arg0: i32) -> (i32, i32, i32) {
    %c0_i32 = arith.constant 0 : i32
    %c0_i32_0 = arith.constant 0 : i32
    %c0_i32_1 = arith.constant 0 : i32
    return %arg0, %c0_i32, %c0_i32_0 : i32, i32, i32
  }
  func.func @transform_1(%arg0: i32) -> (i32, i32) {
    %c0_i32 = arith.constant 0 : i32
    %c0_i32_0 = arith.constant 0 : i32
    %c0_i32_1 = arith.constant 0 : i32
    return %c0_i32, %c0_i32_0 : i32, i32
  }
  func.func @transform_2(%arg0: i32) -> (i32, i32) {
    %c0_i32 = arith.constant 0 : i32
    %c0_i32_0 = arith.constant 0 : i32
    %c0_i32_1 = arith.constant 0 : i32
    return %c0_i32, %c0_i32_0 : i32, i32
  }
  func.func @transform_3(%arg0: i32) -> (i32, i32) {
    %c0_i32 = arith.constant 0 : i32
    %c0_i32_0 = arith.constant 0 : i32
    %c0_i32_1 = arith.constant 0 : i32
    return %c0_i32, %c0_i32_0 : i32, i32
  }
  func.func @transform_4(%arg0: i32) -> (i32, i32) {
    %c0_i32 = arith.constant 0 : i32
    %c0_i32_0 = arith.constant 0 : i32
    %c0_i32_1 = arith.constant 0 : i32
    return %c0_i32, %c0_i32_0 : i32, i32
  }
  func.func @transform_5(%arg0: i32) -> (i32, i32) {
    %c0_i32 = arith.constant 0 : i32
    %c0_i32_0 = arith.constant 0 : i32
    %c0_i32_1 = arith.constant 0 : i32
    return %c0_i32, %c0_i32_0 : i32, i32
  }
  func.func @transform_6(%arg0: i32) -> (i32, i32) {
    %c0_i32 = arith.constant 0 : i32
    %c0_i32_0 = arith.constant 0 : i32
    %c0_i32_1 = arith.constant 0 : i32
    return %c0_i32, %c0_i32_0 : i32, i32
  }
  func.func @transform_7(%arg0: i32) -> (i32, i32) {
    %c0_i32 = arith.constant 0 : i32
    %c0_i32_0 = arith.constant 0 : i32
    %c0_i32_1 = arith.constant 0 : i32
    return %c0_i32, %c0_i32_0 : i32, i32
  }
  func.func @transform_8(%arg0: i32) -> (i32, i32) {
    %c0_i32 = arith.constant 0 : i32
    %c0_i32_0 = arith.constant 0 : i32
    %c0_i32_1 = arith.constant 0 : i32
    return %c0_i32, %c0_i32_0 : i32, i32
  }
  func.func @transform_9(%arg0: i32) -> (i32, i32) {
    %c0_i32 = arith.constant 0 : i32
    %c0_i32_0 = arith.constant 0 : i32
    %c0_i32_1 = arith.constant 0 : i32
    return %c0_i32, %c0_i32_0 : i32, i32
  }
  func.func @transform_10(%arg0: i32) -> (i32, i32) {
    %c0_i32 = arith.constant 0 : i32
    %c0_i32_0 = arith.constant 0 : i32
    %c0_i32_1 = arith.constant 0 : i32
    return %c0_i32, %c0_i32_0 : i32, i32
  }
  func.func @transform_11(%arg0: i32) -> (i32, i32) {
    %c0_i32 = arith.constant 0 : i32
    %c0_i32_0 = arith.constant 0 : i32
    %c0_i32_1 = arith.constant 0 : i32
    return %c0_i32, %c0_i32_0 : i32, i32
  }
  func.func @transform_12(%arg0: i32) -> (i32, i32) {
    %c0_i32 = arith.constant 0 : i32
    %c0_i32_0 = arith.constant 0 : i32
    %c0_i32_1 = arith.constant 0 : i32
    return %c0_i32, %c0_i32_0 : i32, i32
  }
  func.func @transform_13(%arg0: i32) -> (i32, i32, i32) {
    %c0_i32 = arith.constant 0 : i32
    %c0_i32_0 = arith.constant 0 : i32
    %c0_i32_1 = arith.constant 0 : i32
    return %arg0, %c0_i32, %c0_i32_0 : i32, i32, i32
  }
}

</mosaic_0001>

<llo_original>
// kernel: tpu_custom_call.1
$region0: #{tpu_custom_call.1}
  #allocation0 [shape = 'u32[]', space=smem, size = 0x4, offset = 0x4, fixed_abs, tag = 'smem constant byte address 0x4 - core index']
  #allocation1 [shape = 'u32[144,128]{1,0:T(1,128)}', space=vmem, size = 0x12000, scoped, tag = 'internal scratch']
  %s0 = inlined_call_operand.vmem [shape: f32[2,8,32], index: 0, kind: input, shape index: {}]
  %s1 = inlined_call_operand.vmem [shape: f32[1,32], index: 1, kind: input, shape index: {}]
  %s2 = inlined_call_operand.vmem [shape: f32[1,32], index: 2, kind: input, shape index: {}]
  %s3 = inlined_call_operand.vmem [shape: f32[32,96], index: 3, kind: input, shape index: {}]
  %s4 = inlined_call_operand.vmem [shape: f32[1,96], index: 4, kind: input, shape index: {}]
  %s5 = inlined_call_operand.vmem [shape: f32[32,32], index: 5, kind: input, shape index: {}]
  %s6 = inlined_call_operand.vmem [shape: f32[1,32], index: 6, kind: input, shape index: {}]
  %s7 = inlined_call_operand.vmem [shape: f32[1,32], index: 7, kind: input, shape index: {}]
  %s8 = inlined_call_operand.vmem [shape: f32[1,32], index: 8, kind: input, shape index: {}]
  %s9 = inlined_call_operand.vmem [shape: f32[32,128], index: 9, kind: input, shape index: {}]
  %s10 = inlined_call_operand.vmem [shape: f32[1,128], index: 10, kind: input, shape index: {}]
  %s11 = inlined_call_operand.vmem [shape: f32[128,32], index: 11, kind: input, shape index: {}]
  %s12 = inlined_call_operand.vmem [shape: f32[1,32], index: 12, kind: input, shape index: {}]
  %s13 = inlined_call_operand.hbm [shape: f32[2,8,32], index: 13, kind: output, shape index: {}]
  %s14 = sld [smem:[#allocation0]]
  $region85: #{tpu_custom_call.1} parent=0
    _
  %s16 = ssub.s32 1, %s14
  %s17 = scalar_select 0, %s16, %s14
  $region1: #{tpu_custom_call.1} parent=0
    #allocation2 [shape = 'u8[8192]{0}', space=vmem, size = 0x2000, scoped, tag = 'output window, operand 0']
    #allocation3 [shape = 's32[2]{0}', space=sflag, size = 0x8, scoped, tag = 'scoped memory for tpu_custom_call.1']
    %18 = vsyncpa [#allocation3], 0
    %s19 = scalar_lea.sflag [#allocation3], 1
    %20 = vsyncpa %s19, 0
    loop: start=0, step=1, limit=4
    $region2: #{tpu_custom_call.1} parent=1 // loop_pre_header
      _
    $region3: #{tpu_custom_call.1} parent=1 // loop_header
      %s22 = sphi 0, %s26
      %p23 = scmp.ge.s32.totalorder %s22, 4
      %s32 = sphi 0, %s34
      %s35 = sphi 0, %s32
      %s36 = sphi 0, %s35
      %s52 = sphi 0, %s36
      %s56 = sphi 0, %s56
      %s58 = sphi 0, %s56
      %s59 = sphi 0, %s58
      %s73 = sphi 0, %s59
      %s77 = sphi 0, %s77
      %s79 = sphi 0, %s77
      %s80 = sphi 0, %s79
      %s94 = sphi 0, %s80
      %s98 = sphi 0, %s98
      %s100 = sphi 0, %s98
      %s101 = sphi 0, %s100
      %s115 = sphi 0, %s101
      %s119 = sphi 0, %s119
      %s121 = sphi 0, %s119
      %s122 = sphi 0, %s121
      %s136 = sphi 0, %s122
      %s140 = sphi 0, %s140
      %s142 = sphi 0, %s140
      %s143 = sphi 0, %s142
      %s157 = sphi 0, %s143
      %s161 = sphi 0, %s161
      %s163 = sphi 0, %s161
      %s164 = sphi 0, %s163
      %s178 = sphi 0, %s164
      %s182 = sphi 0, %s182
      %s184 = sphi 0, %s182
      %s185 = sphi 0, %s184
      %s199 = sphi 0, %s185
      %s203 = sphi 0, %s203
      %s205 = sphi 0, %s203
      %s206 = sphi 0, %s205
      %s220 = sphi 0, %s206
      %s224 = sphi 0, %s224
      %s226 = sphi 0, %s224
      %s227 = sphi 0, %s226
      %s241 = sphi 0, %s227
      %s245 = sphi 0, %s245
      %s247 = sphi 0, %s245
      %s248 = sphi 0, %s247
      %s262 = sphi 0, %s248
      %s266 = sphi 0, %s266
      %s268 = sphi 0, %s266
      %s269 = sphi 0, %s268
      %s283 = sphi 0, %s269
      %s287 = sphi 0, %s287
      %s289 = sphi 0, %s287
      %s290 = sphi 0, %s289
      %s304 = sphi 0, %s290
      %s310 = sphi 0, %s312
      %s313 = sphi 0, %s310
      %s314 = sphi 0, %s313
      %s330 = sphi 0, %s314
    $region4: #{tpu_custom_call.1} parent=1 // loop_header_branch
      %25 = sbr.rel (%p23) target = $region8
    $region5: #{tpu_custom_call.1} parent=1 // loop_body
      %s27 = ssub.s32 %s22, 1
      %s28 = ssub.s32 %s22, 2
      %s29 = sadd.s32 %s22, 1
      %s30 = ssub.s32 %s22, %s29
      %p31 = scmp.eq.s32.totalorder %s30, 0
      %s33 = sadd.s32 %s32, 1
      %s34 = scalar_select %p31, %s32, %s33
      %p37 = pneg %p31
      %p38 = scmp.eq.s32.totalorder %s22, 1
      %p39 = por %p37, %p38
      %p40 = scmp.ne.s32.totalorder %s32, %s35
      %p41 = scmp.eq.s32.totalorder %s22, 0
      %p42 = por %p40, %p41
      %p43 = scmp.ne.s32.totalorder %s32, %s35
      %p44 = scmp.eq.s32.totalorder %s27, 1
      %p45 = por %p43, %p44
      %p46 = scmp.ne.s32.totalorder %s35, %s36
      %p47 = scmp.eq.s32.totalorder %s27, 0
      %p48 = por %p46, %p47
      %p49 = scmp.ne.s32.totalorder %s35, %s36
      %p50 = scmp.eq.s32.totalorder %s28, 1
      %p51 = por %p49, %p50
      %p53 = scmp.ne.s32.totalorder %s36, %s52
      %p54 = scmp.eq.s32.totalorder %s28, 0
      %p55 = por %p53, %p54
      %s57 = sadd.s32 %s56, 1
      %p60 = scmp.eq.s32.totalorder %s22, 1
      %p61 = scmp.ne.s32.totalorder %s56, %s58
      %p62 = scmp.eq.s32.totalorder %s22, 0
      %p63 = por %p61, %p62
      %p64 = scmp.ne.s32.totalorder %s56, %s58
      %p65 = scmp.eq.s32.totalorder %s27, 1
      %p66 = por %p64, %p65
      %p67 = scmp.ne.s32.totalorder %s58, %s59
      %p68 = scmp.eq.s32.totalorder %s27, 0
      %p69 = por %p67, %p68
      %p70 = scmp.ne.s32.totalorder %s58, %s59
      %p71 = scmp.eq.s32.totalorder %s28, 1
      %p72 = por %p70, %p71
      %p74 = scmp.ne.s32.totalorder %s59, %s73
      %p75 = scmp.eq.s32.totalorder %s28, 0
      %p76 = por %p74, %p75
      %s78 = sadd.s32 %s77, 1
      %p81 = scmp.eq.s32.totalorder %s22, 1
      %p82 = scmp.ne.s32.totalorder %s77, %s79
      %p83 = scmp.eq.s32.totalorder %s22, 0
      %p84 = por %p82, %p83
      %p85 = scmp.ne.s32.totalorder %s77, %s79
      %p86 = scmp.eq.s32.totalorder %s27, 1
      %p87 = por %p85, %p86
      %p88 = scmp.ne.s32.totalorder %s79, %s80
      %p89 = scmp.eq.s32.totalorder %s27, 0
      %p90 = por %p88, %p89
      %p91 = scmp.ne.s32.totalorder %s79, %s80
      %p92 = scmp.eq.s32.totalorder %s28, 1
      %p93 = por %p91, %p92
      %p95 = scmp.ne.s32.totalorder %s80, %s94
      %p96 = scmp.eq.s32.totalorder %s28, 0
      %p97 = por %p95, %p96
      %s99 = sadd.s32 %s98, 1
      %p102 = scmp.eq.s32.totalorder %s22, 1
      %p103 = scmp.ne.s32.totalorder %s98, %s100
      %p104 = scmp.eq.s32.totalorder %s22, 0
      %p105 = por %p103, %p104
      %p106 = scmp.ne.s32.totalorder %s98, %s100
      %p107 = scmp.eq.s32.totalorder %s27, 1
      %p108 = por %p106, %p107
      %p109 = scmp.ne.s32.totalorder %s100, %s101
      %p110 = scmp.eq.s32.totalorder %s27, 0
      %p111 = por %p109, %p110
      %p112 = scmp.ne.s32.totalorder %s100, %s101
      %p113 = scmp.eq.s32.totalorder %s28, 1
      %p114 = por %p112, %p113
      %p116 = scmp.ne.s32.totalorder %s101, %s115
      %p117 = scmp.eq.s32.totalorder %s28, 0
      %p118 = por %p116, %p117
      %s120 = sadd.s32 %s119, 1
      %p123 = scmp.eq.s32.totalorder %s22, 1
      %p124 = scmp.ne.s32.totalorder %s119, %s121
      %p125 = scmp.eq.s32.totalorder %s22, 0
      %p126 = por %p124, %p125
      %p127 = scmp.ne.s32.totalorder %s119, %s121
      %p128 = scmp.eq.s32.totalorder %s27, 1
      %p129 = por %p127, %p128
      %p130 = scmp.ne.s32.totalorder %s121, %s122
      %p131 = scmp.eq.s32.totalorder %s27, 0
      %p132 = por %p130, %p131
      %p133 = scmp.ne.s32.totalorder %s121, %s122
      %p134 = scmp.eq.s32.totalorder %s28, 1
      %p135 = por %p133, %p134
      %p137 = scmp.ne.s32.totalorder %s122, %s136
      %p138 = scmp.eq.s32.totalorder %s28, 0
      %p139 = por %p137, %p138
      %s141 = sadd.s32 %s140, 1
      %p144 = scmp.eq.s32.totalorder %s22, 1
      %p145 = scmp.ne.s32.totalorder %s140, %s142
      %p146 = scmp.eq.s32.totalorder %s22, 0
      %p147 = por %p145, %p146
      %p148 = scmp.ne.s32.totalorder %s140, %s142
      %p149 = scmp.eq.s32.totalorder %s27, 1
      %p150 = por %p148, %p149
      %p151 = scmp.ne.s32.totalorder %s142, %s143
      %p152 = scmp.eq.s32.totalorder %s27, 0
      %p153 = por %p151, %p152
      %p154 = scmp.ne.s32.totalorder %s142, %s143
      %p155 = scmp.eq.s32.totalorder %s28, 1
      %p156 = por %p154, %p155
      %p158 = scmp.ne.s32.totalorder %s143, %s157
      %p159 = scmp.eq.s32.totalorder %s28, 0
      %p160 = por %p158, %p159
      %s162 = sadd.s32 %s161, 1
      %p165 = scmp.eq.s32.totalorder %s22, 1
      %p166 = scmp.ne.s32.totalorder %s161, %s163
      %p167 = scmp.eq.s32.totalorder %s22, 0
      %p168 = por %p166, %p167
      %p169 = scmp.ne.s32.totalorder %s161, %s163
      %p170 = scmp.eq.s32.totalorder %s27, 1
      %p171 = por %p169, %p170
      %p172 = scmp.ne.s32.totalorder %s163, %s164
      %p173 = scmp.eq.s32.totalorder %s27, 0
      %p174 = por %p172, %p173
      %p175 = scmp.ne.s32.totalorder %s163, %s164
      %p176 = scmp.eq.s32.totalorder %s28, 1
      %p177 = por %p175, %p176
      %p179 = scmp.ne.s32.totalorder %s164, %s178
      %p180 = scmp.eq.s32.totalorder %s28, 0
      %p181 = por %p179, %p180
      %s183 = sadd.s32 %s182, 1
      %p186 = scmp.eq.s32.totalorder %s22, 1
      %p187 = scmp.ne.s32.totalorder %s182, %s184
      %p188 = scmp.eq.s32.totalorder %s22, 0
      %p189 = por %p187, %p188
      %p190 = scmp.ne.s32.totalorder %s182, %s184
      %p191 = scmp.eq.s32.totalorder %s27, 1
      %p192 = por %p190, %p191
      %p193 = scmp.ne.s32.totalorder %s184, %s185
      %p194 = scmp.eq.s32.totalorder %s27, 0
      %p195 = por %p193, %p194
      %p196 = scmp.ne.s32.totalorder %s184, %s185
      %p197 = scmp.eq.s32.totalorder %s28, 1
      %p198 = por %p196, %p197
      %p200 = scmp.ne.s32.totalorder %s185, %s199
      %p201 = scmp.eq.s32.totalorder %s28, 0
      %p202 = por %p200, %p201
      %s204 = sadd.s32 %s203, 1
      %p207 = scmp.eq.s32.totalorder %s22, 1
      %p208 = scmp.ne.s32.totalorder %s203, %s205
      %p209 = scmp.eq.s32.totalorder %s22, 0
      %p210 = por %p208, %p209
      %p211 = scmp.ne.s32.totalorder %s203, %s205
      %p212 = scmp.eq.s32.totalorder %s27, 1
      %p213 = por %p211, %p212
      %p214 = scmp.ne.s32.totalorder %s205, %s206
      %p215 = scmp.eq.s32.totalorder %s27, 0
      %p216 = por %p214, %p215
      %p217 = scmp.ne.s32.totalorder %s205, %s206
      %p218 = scmp.eq.s32.totalorder %s28, 1
      %p219 = por %p217, %p218
      %p221 = scmp.ne.s32.totalorder %s206, %s220
      %p222 = scmp.eq.s32.totalorder %s28, 0
      %p223 = por %p221, %p222
      %s225 = sadd.s32 %s224, 1
      %p228 = scmp.eq.s32.totalorder %s22, 1
      %p229 = scmp.ne.s32.totalorder %s224, %s226
      %p230 = scmp.eq.s32.totalorder %s22, 0
      %p231 = por %p229, %p230
      %p232 = scmp.ne.s32.totalorder %s224, %s226
      %p233 = scmp.eq.s32.totalorder %s27, 1
      %p234 = por %p232, %p233
      %p235 = scmp.ne.s32.totalorder %s226, %s227
      %p236 = scmp.eq.s32.totalorder %s27, 0
      %p237 = por %p235, %p236
      %p238 = scmp.ne.s32.totalorder %s226, %s227
      %p239 = scmp.eq.s32.totalorder %s28, 1
      %p240 = por %p238, %p239
      %p242 = scmp.ne.s32.totalorder %s227, %s241
      %p243 = scmp.eq.s32.totalorder %s28, 0
      %p244 = por %p242, %p243
      %s246 = sadd.s32 %s245, 1
      %p249 = scmp.eq.s32.totalorder %s22, 1
      %p250 = scmp.ne.s32.totalorder %s245, %s247
      %p251 = scmp.eq.s32.totalorder %s22, 0
      %p252 = por %p250, %p251
      %p253 = scmp.ne.s32.totalorder %s245, %s247
      %p254 = scmp.eq.s32.totalorder %s27, 1
      %p255 = por %p253, %p254
      %p256 = scmp.ne.s32.totalorder %s247, %s248
      %p257 = scmp.eq.s32.totalorder %s27, 0
      %p258 = por %p256, %p257
      %p259 = scmp.ne.s32.totalorder %s247, %s248
      %p260 = scmp.eq.s32.totalorder %s28, 1
      %p261 = por %p259, %p260
      %p263 = scmp.ne.s32.totalorder %s248, %s262
      %p264 = scmp.eq.s32.totalorder %s28, 0
      %p265 = por %p263, %p264
      %s267 = sadd.s32 %s266, 1
      %p270 = scmp.eq.s32.totalorder %s22, 1
      %p271 = scmp.ne.s32.totalorder %s266, %s268
      %p272 = scmp.eq.s32.totalorder %s22, 0
      %p273 = por %p271, %p272
      %p274 = scmp.ne.s32.totalorder %s266, %s268
      %p275 = scmp.eq.s32.totalorder %s27, 1
      %p276 = por %p274, %p275
      %p277 = scmp.ne.s32.totalorder %s268, %s269
      %p278 = scmp.eq.s32.totalorder %s27, 0
      %p279 = por %p277, %p278
      %p280 = scmp.ne.s32.totalorder %s268, %s269
      %p281 = scmp.eq.s32.totalorder %s28, 1
      %p282 = por %p280, %p281
      %p284 = scmp.ne.s32.totalorder %s269, %s283
      %p285 = scmp.eq.s32.totalorder %s28, 0
      %p286 = por %p284, %p285
      %s288 = sadd.s32 %s287, 1
      %p291 = scmp.eq.s32.totalorder %s22, 1
      %p292 = scmp.ne.s32.totalorder %s287, %s289
      %p293 = scmp.eq.s32.totalorder %s22, 0
      %p294 = por %p292, %p293
      %p295 = scmp.ne.s32.totalorder %s287, %s289
      %p296 = scmp.eq.s32.totalorder %s27, 1
      %p297 = por %p295, %p296
      %p298 = scmp.ne.s32.totalorder %s289, %s290
      %p299 = scmp.eq.s32.totalorder %s27, 0
      %p300 = por %p298, %p299
      %p301 = scmp.ne.s32.totalorder %s289, %s290
      %p302 = scmp.eq.s32.totalorder %s28, 1
      %p303 = por %p301, %p302
      %p305 = scmp.ne.s32.totalorder %s290, %s304
      %p306 = scmp.eq.s32.totalorder %s28, 0
      %p307 = por %p305, %p306
      %s308 = ssub.s32 %s22, %s29
      %p309 = scmp.eq.s32.totalorder %s308, 0
      %s311 = sadd.s32 %s310, 1
      %s312 = scalar_select %p309, %s310, %s311
      %p315 = pneg %p309
      %p316 = scmp.eq.s32.totalorder %s22, 1
      %p317 = por %p315, %p316
      %p318 = scmp.ne.s32.totalorder %s310, %s313
      %p319 = scmp.eq.s32.totalorder %s22, 0
      %p320 = por %p318, %p319
      %p321 = scmp.ne.s32.totalorder %s310, %s313
      %p322 = scmp.eq.s32.totalorder %s27, 1
      %p323 = por %p321, %p322
      %p324 = scmp.ne.s32.totalorder %s313, %s314
      %p325 = scmp.eq.s32.totalorder %s27, 0
      %p326 = por %p324, %p325
      %p327 = scmp.ne.s32.totalorder %s313, %s314
      %p328 = scmp.eq.s32.totalorder %s28, 1
      %p329 = por %p327, %p328
      %p331 = scmp.ne.s32.totalorder %s314, %s330
      %p332 = scmp.eq.s32.totalorder %s28, 0
      %p333 = por %p331, %p332
      %p334 = scmp.le.s32.totalorder 1, %s22
      %p335 = scmp.lt.s32.totalorder %s22, 3
      %p336 = pnand %p334, %p335
      %p337 = pneg %p336
      // Predicated region
      $region9: #{tpu_custom_call.1} parent=5 // pred_check
        _
      $region10: #{tpu_custom_call.1} parent=5 // pred_check_branch
        %339 = sbr.rel (%p336) target = $region12
      $region11: #{tpu_custom_call.1} parent=5 // pred_region
        %s340 = ssub.s32 %s22, 1
        // Predicated region
        $region13: #{tpu_custom_call.1} parent=11 // pred_check
          %p341 = pneg %p69
        $region14: #{tpu_custom_call.1} parent=11 // pred_check_branch
          %343 = sbr.rel (%p341) target = $region16
        $region15: #{tpu_custom_call.1} parent=11 // pred_region
          _
        $region16: #{tpu_custom_call.1} parent=11 // pred_fallthru
          _
        // Predicated region
        $region17: #{tpu_custom_call.1} parent=11 // pred_check
          %p344 = pneg %p90
        $region18: #{tpu_custom_call.1} parent=11 // pred_check_branch
          %346 = sbr.rel (%p344) target = $region20
        $region19: #{tpu_custom_call.1} parent=11 // pred_region
          _
        $region20: #{tpu_custom_call.1} parent=11 // pred_fallthru
          _
        // Predicated region
        $region21: #{tpu_custom_call.1} parent=11 // pred_check
          %p347 = pneg %p111
        $region22: #{tpu_custom_call.1} parent=11 // pred_check_branch
          %349 = sbr.rel (%p347) target = $region24
        $region23: #{tpu_custom_call.1} parent=11 // pred_region
          _
        $region24: #{tpu_custom_call.1} parent=11 // pred_fallthru
          _
        // Predicated region
        $region25: #{tpu_custom_call.1} parent=11 // pred_check
          %p350 = pneg %p132
        $region26: #{tpu_custom_call.1} parent=11 // pred_check_branch
          %352 = sbr.rel (%p350) target = $region28
        $region27: #{tpu_custom_call.1} parent=11 // pred_region
          _
        $region28: #{tpu_custom_call.1} parent=11 // pred_fallthru
          _
        // Predicated region
        $region29: #{tpu_custom_call.1} parent=11 // pred_check
          %p353 = pneg %p153
        $region30: #{tpu_custom_call.1} parent=11 // pred_check_branch
          %355 = sbr.rel (%p353) target = $region32
        $region31: #{tpu_custom_call.1} parent=11 // pred_region
          _
        $region32: #{tpu_custom_call.1} parent=11 // pred_fallthru
          _
        // Predicated region
        $region33: #{tpu_custom_call.1} parent=11 // pred_check
          %p356 = pneg %p174
        $region34: #{tpu_custom_call.1} parent=11 // pred_check_branch
          %358 = sbr.rel (%p356) target = $region36
        $region35: #{tpu_custom_call.1} parent=11 // pred_region
          _
        $region36: #{tpu_custom_call.1} parent=11 // pred_fallthru
          _
        // Predicated region
        $region37: #{tpu_custom_call.1} parent=11 // pred_check
          %p359 = pneg %p195
        $region38: #{tpu_custom_call.1} parent=11 // pred_check_branch
          %361 = sbr.rel (%p359) target = $region40
        $region39: #{tpu_custom_call.1} parent=11 // pred_region
          _
        $region40: #{tpu_custom_call.1} parent=11 // pred_fallthru
          _
        // Predicated region
        $region41: #{tpu_custom_call.1} parent=11 // pred_check
          %p362 = pneg %p216
        $region42: #{tpu_custom_call.1} parent=11 // pred_check_branch
          %364 = sbr.rel (%p362) target = $region44
        $region43: #{tpu_custom_call.1} parent=11 // pred_region
          _
        $region44: #{tpu_custom_call.1} parent=11 // pred_fallthru
          _
        // Predicated region
        $region45: #{tpu_custom_call.1} parent=11 // pred_check
          %p365 = pneg %p237
        $region46: #{tpu_custom_call.1} parent=11 // pred_check_branch
          %367 = sbr.rel (%p365) target = $region48
        $region47: #{tpu_custom_call.1} parent=11 // pred_region
          _
        $region48: #{tpu_custom_call.1} parent=11 // pred_fallthru
          _
        // Predicated region
        $region49: #{tpu_custom_call.1} parent=11 // pred_check
          %p368 = pneg %p258
        $region50: #{tpu_custom_call.1} parent=11 // pred_check_branch
          %370 = sbr.rel (%p368) target = $region52
        $region51: #{tpu_custom_call.1} parent=11 // pred_region
          _
        $region52: #{tpu_custom_call.1} parent=11 // pred_fallthru
          _
        // Predicated region
        $region53: #{tpu_custom_call.1} parent=11 // pred_check
          %p371 = pneg %p279
        $region54: #{tpu_custom_call.1} parent=11 // pred_check_branch
          %373 = sbr.rel (%p371) target = $region56
        $region55: #{tpu_custom_call.1} parent=11 // pred_region
          _
        $region56: #{tpu_custom_call.1} parent=11 // pred_fallthru
          _
        // Predicated region
        $region57: #{tpu_custom_call.1} parent=11 // pred_check
          %p374 = pneg %p300
        $region58: #{tpu_custom_call.1} parent=11 // pred_check_branch
          %376 = sbr.rel (%p374) target = $region60
        $region59: #{tpu_custom_call.1} parent=11 // pred_region
          _
        $region60: #{tpu_custom_call.1} parent=11 // pred_fallthru
          _
      $region12: #{tpu_custom_call.1} parent=5 // pred_fallthru
        _
      %p377 = scmp.lt.s32.totalorder %s22, 2
      // Predicated region
      $region61: #{tpu_custom_call.1} parent=5 // pred_check
        %p378 = pneg %p377
      $region62: #{tpu_custom_call.1} parent=5 // pred_check_branch
        %380 = sbr.rel (%p378) target = $region64
      $region63: #{tpu_custom_call.1} parent=5 // pred_region
        // Predicated region
        $region65: #{tpu_custom_call.1} parent=63 // pred_check
          %p381 = pneg %p42
        $region66: #{tpu_custom_call.1} parent=63 // pred_check_branch
          %383 = sbr.rel (%p381) target = $region68
        $region67: #{tpu_custom_call.1} parent=63 // pred_region
          %p384 = scmp.lt.s32.totalorder %s22, 1
          %s385 = scalar_select %p384, %s22, 1
          %s386 = smul.addr %s385, 8
          %s387 = scalar_lea.vmem %s0, %s386
        $region68: #{tpu_custom_call.1} parent=63 // pred_fallthru
          _
      $region64: #{tpu_custom_call.1} parent=5 // pred_fallthru
        _
      %p388 = scmp.le.s32.totalorder 1, %s22
      %p389 = scmp.lt.s32.totalorder %s22, 3
      %p390 = pnand %p388, %p389
      %p391 = pneg %p390
      // Predicated region
      $region69: #{tpu_custom_call.1} parent=5 // pred_check
        _
      $region70: #{tpu_custom_call.1} parent=5 // pred_check_branch
        %393 = sbr.rel (%p390) target = $region72
      $region71: #{tpu_custom_call.1} parent=5 // pred_region
        %s394 = ssub.s32 %s22, 1
        %p395 = scmp.lt.s32.totalorder %s27, 1
        %s396 = scalar_select %p395, %s27, 1
        %s397 = smul.addr %s396, 8
        %s398 = scalar_lea.vmem %s0, %s397
        %p399 = pneg %p48
        %p400 = pneg %p45
        %p401 = pneg %p69
        %p402 = pneg %p66
        %p403 = pneg %p90
        %p404 = pneg %p87
        %p405 = pneg %p111
        %p406 = pneg %p108
        %p407 = pneg %p132
        %p408 = pneg %p129
        %p409 = pneg %p153
        %p410 = pneg %p150
        %p411 = pneg %p174
        %p412 = pneg %p171
        %p413 = pneg %p195
        %p414 = pneg %p192
        %p415 = pneg %p216
        %p416 = pneg %p213
        %p417 = pneg %p237
        %p418 = pneg %p234
        %p419 = pneg %p258
        %p420 = pneg %p255
        %p421 = pneg %p279
        %p422 = pneg %p276
        %p423 = pneg %p300
        %p424 = pneg %p297
        %p425 = pneg %p326
        %p426 = pneg %p323
        %s427 = sand.u32 %s313, 1
        %s428 = scalar_lea.sflag [#allocation3], %s427
        %s429 = sand.u32 %s313, 1
        %s430 = smul.addr %s429, 8
        %s431 = scalar_lea.vmem [#allocation2], %s430
        %p432 = scmp.lt.s32.totalorder %s27, 1
        %s433 = scalar_select %p432, %s27, 1
        %s434 = smul.addr %s433, 8
        %s435 = scalar_lea.vmem %s0, %s434
        %v436 = vld [vmem:[%s435] sm:$0xff]
        %v437 = vld [vmem:[%s1] sm:$0x1]
        %v438 = vld [vmem:[%s2] sm:$0x1]
        %vm439 = vcmask 261120
        %v440 = vsel %vm439, %v436, 0.0
        %441 = vadd.xlane.f32.xlu0 %v440
        %v442 = vpop.xlane.xlu0 %441
        %v443 = vrcp.pop 32.0
        %v444 = vmul.f32 %v442, %v443
        %v445 = vsub.f32 %v436, %v444
        %v446 = vmul.f32 %v445, %v445
        %v447 = vsel %vm439, %v446, 0.0
        %448 = vadd.xlane.f32.xlu0 %v447
        %v449 = vpop.xlane.xlu0 %448
        %v450 = vmul.f32 %v449, %v443
        %v451 = vadd.f32 %v450, 1e-05
        %v452 = vrsqrt.pop %v451
        %v453 = vmul.f32 %v445, %v452
        %v455 = vlaneseq
        %v456 = vshrl.u32 %v455, 7
        %v457 = vsub.s32 0, %v456
        %v458 = vrot.slane %v437, %v457
        %v460 = vmul.f32 %v453, %v458
        %v462 = vlaneseq
        %v463 = vshrl.u32 %v462, 7
        %v464 = vsub.s32 0, %v463
        %v465 = vrot.slane %v438, %v464
        %v467 = vadd.f32 %v460, %v465
        %v468 = vld [vmem:[%s3] sm:$0xff]
        %v469 = vld [vmem:[%s3 + $0x8] sm:$0xff]
        %v470 = vld [vmem:[%s3 + $0x10] sm:$0xff]
        %v471 = vld [vmem:[%s3 + $0x18] sm:$0xff]
        %v472 = vld [vmem:[%s4] sm:$0x1]
        %v474 = vlaneseq
        %v475 = vshrl.u32 %v474, 7
        %v476 = vsub.s32 0, %v475
        %v477 = vrot.slane %v472, %v476
        %v480 = vsel %vm439, %v467, 0
        %482 = vmatprep.subr.mxu0 0.0
        %483 = vmatpush1.msra.mxu0 0.0
        %484 = vmatprep.subr.mxu0 0.0
        %485 = vmatpush1.msra.mxu0 0.0
        %486 = vmatprep.subr.mxu0 0.0
        %487 = vmatpush1.msra.mxu0 0.0
        %488 = vmatprep.subr.mxu0 0.0
        %489 = vmatpush1.msra.mxu0 0.0
        %490 = vmatprep.subr.mxu0 0.0
        %491 = vmatpush1.msra.mxu0 0.0
        %492 = vmatprep.subr.mxu0 0.0
        %493 = vmatpush1.msra.mxu0 0.0
        %494 = vmatprep.subr.mxu0 0.0
        %495 = vmatpush1.msra.mxu0 0.0
        %496 = vmatprep.subr.mxu0 0.0
        %497 = vmatpush1.msra.mxu0 0.0
        %498 = vmatprep.subr.mxu0 0.0
        %499 = vmatpush1.msra.mxu0 0.0
        %500 = vmatprep.subr.mxu0 0.0
        %501 = vmatpush1.msra.mxu0 0.0
        %502 = vmatprep.subr.mxu0 0.0
        %503 = vmatpush1.msra.mxu0 0.0
        %504 = vmatprep.subr.mxu0 0.0
        %505 = vmatpush1.msra.mxu0 0.0
        %506 = vmatprep.subr.mxu0 0.0
        %507 = vmatpush1.msra.mxu0 %v471
        %508 = vmatprep.subr.mxu0 0.0
        %509 = vmatpush1.msra.mxu0 %v470
        %510 = vmatprep.subr.mxu0 0.0
        %511 = vmatpush1.msra.mxu0 %v469
        %512 = vmatprep.subr.mxu0 0.0
        %513 = vmatpush1.msra.mxu0 %v468
        %514 = vmatprep.subr.mxu0 0.0
        %515 = vmatpush2.msra.mxu0 0.0
        %516 = vmatprep.subr.mxu0 0.0
        %517 = vmatpush2.msra.mxu0 0.0
        %518 = vmatprep.subr.mxu0 0.0
        %519 = vmatpush2.msra.mxu0 0.0
        %520 = vmatprep.subr.mxu0 0.0
        %521 = vmatpush2.msra.mxu0 0.0
        %522 = vmatprep.subr.mxu0 0.0
        %523 = vmatpush2.msra.mxu0 0.0
        %524 = vmatprep.subr.mxu0 0.0
        %525 = vmatpush2.msra.mxu0 0.0
        %526 = vmatprep.subr.mxu0 0.0
        %527 = vmatpush2.msra.mxu0 0.0
        %528 = vmatprep.subr.mxu0 0.0
        %529 = vmatpush2.msra.mxu0 0.0
        %530 = vmatprep.subr.mxu0 0.0
        %531 = vmatpush2.msra.mxu0 0.0
        %532 = vmatprep.subr.mxu0 0.0
        %533 = vmatpush2.msra.mxu0 0.0
        %534 = vmatprep.subr.mxu0 0.0
        %535 = vmatpush2.msra.mxu0 0.0
        %536 = vmatprep.subr.mxu0 0.0
        %537 = vmatpush2.msra.mxu0 0.0
        %538 = vmatprep.subr.mxu0 0.0
        %539 = vmatpush2.msra.mxu0 0.0
        %540 = vmatprep.subr.mxu0 0.0
        %541 = vmatpush2.msra.mxu0 0.0
        %542 = vmatprep.subr.mxu0 0.0
        %543 = vmatpush2.msra.mxu0 0.0
        %544 = vmatprep.subr.mxu0 0.0
        %545 = vmatpush2.msra.mxu0 0.0
        %546 = vmatprep.mubr.f32.mxu0 0.0
        %547 = vmatmul.mubr.f32.gmra.mxu0 %v480
        %v548 = vpop.f32.mrf.mxu0
        %v549 = vadd.f32 %v477, %v548
        %v550 = vpop.f32.mrf.mxu0
        %551 = vdwg.mxu0
        %553 = vrot.lane.b32.xlu0 %v549, 120
        %v554 = vpop.permute.xlu0 %553
        %556 = vrot.lane.b32.xlu0 %v549, 112
        %v557 = vpop.permute.xlu0 %556
        %559 = vrot.lane.b32.xlu0 %v549, 104
        %v560 = vpop.permute.xlu0 %559
        %v562 = vcombine.low %v549, %v557
        %v563 = vcombine.high %v549, %v557
        %v565 = vunpack.c.l.s4 1983009808
        %v566 = vunpack.c.0.s8 %v565
        %v567 = vlaneseq
        %v568 = vshrl.u32 %v567, 7
        %v569 = vsub.s32 %v566, %v568
        %v570 = vrot.slane %v562, %v569
        %v572 = vunpack.c.l.s4 1983009808
        %v573 = vunpack.c.0.s8 %v572
        %v574 = vlaneseq
        %v575 = vshrl.u32 %v574, 7
        %v576 = vsub.s32 %v573, %v575
        %v577 = vrot.slane %v563, %v576
        %v578 = vcombine.low %v554, %v560
        %v579 = vcombine.high %v554, %v560
        %v581 = vunpack.c.l.s4 1983009808
        %v582 = vunpack.c.0.s8 %v581
        %v583 = vlaneseq
        %v584 = vshrl.u32 %v583, 7
        %v585 = vsub.s32 %v582, %v584
        %v586 = vrot.slane %v578, %v585
        %v588 = vunpack.c.l.s4 1983009808
        %v589 = vunpack.c.0.s8 %v588
        %v590 = vlaneseq
        %v591 = vshrl.u32 %v590, 7
        %v592 = vsub.s32 %v589, %v591
        %v593 = vrot.slane %v579, %v592
        %v594 = vcombine.low %v570, %v586
        %v595 = vcombine.high %v570, %v586
        %v597 = vunpack.c.l.s4 1934713408
        %v598 = vunpack.c.0.s8 %v597
        %v599 = vlaneseq
        %v600 = vshrl.u32 %v599, 7
        %v601 = vsub.s32 %v598, %v600
        %v602 = vrot.slane %v594, %v601
        %v604 = vunpack.c.l.s4 1934713408
        %v605 = vunpack.c.0.s8 %v604
        %v606 = vlaneseq
        %v607 = vshrl.u32 %v606, 7
        %v608 = vsub.s32 %v605, %v607
        %v609 = vrot.slane %v595, %v608
        %v610 = vcombine.low %v577, %v593
        %v611 = vcombine.high %v577, %v593
        %v613 = vunpack.c.l.s4 1934713408
        %v614 = vunpack.c.0.s8 %v613
        %v615 = vlaneseq
        %v616 = vshrl.u32 %v615, 7
        %v617 = vsub.s32 %v614, %v616
        %v618 = vrot.slane %v610, %v617
        %v620 = vunpack.c.l.s4 1934713408
        %v621 = vunpack.c.0.s8 %v620
        %v622 = vlaneseq
        %v623 = vshrl.u32 %v622, 7
        %v624 = vsub.s32 %v621, %v623
        %v625 = vrot.slane %v611, %v624
        %v626 = vcombine.high %v602, 0.0
        %v627 = vcombine.high %v609, 0.0
        %v628 = vcombine.high %v618, 0.0
        %v629 = vcombine.high %v625, 0.0
        %v630 = vcombine.low %v602, %v609
        %v632 = vunpack.c.l.s4 1983009808
        %v633 = vunpack.c.0.s8 %v632
        %v634 = vlaneseq
        %v635 = vshrl.u32 %v634, 7
        %v636 = vsub.s32 %v633, %v635
        %v637 = vrot.slane %v630, %v636
        %v638 = vcombine.low %v626, %v627
        %v640 = vunpack.c.l.s4 1983009808
        %v641 = vunpack.c.0.s8 %v640
        %v642 = vlaneseq
        %v643 = vshrl.u32 %v642, 7
        %v644 = vsub.s32 %v641, %v643
        %v645 = vrot.slane %v638, %v644
        %v646 = vcombine.low %v618, %v625
        %v648 = vunpack.c.l.s4 1983009808
        %v649 = vunpack.c.0.s8 %v648
        %v650 = vlaneseq
        %v651 = vshrl.u32 %v650, 7
        %v652 = vsub.s32 %v649, %v651
        %v653 = vrot.slane %v646, %v652
        %v654 = vcombine.low %v628, %v629
        %v656 = vunpack.c.l.s4 1983009808
        %v657 = vunpack.c.0.s8 %v656
        %v658 = vlaneseq
        %v659 = vshrl.u32 %v658, 7
        %v660 = vsub.s32 %v657, %v659
        %v661 = vrot.slane %v654, %v660
        %v662 = vcombine.low %v637, %v645
        %v663 = vcombine.high %v637, %v645
        %v665 = vunpack.c.l.s4 1934713408
        %v666 = vunpack.c.0.s8 %v665
        %v667 = vlaneseq
        %v668 = vshrl.u32 %v667, 7
        %v669 = vsub.s32 %v666, %v668
        %v670 = vrot.slane %v662, %v669
        %v672 = vunpack.c.l.s4 1934713408
        %v673 = vunpack.c.0.s8 %v672
        %v674 = vlaneseq
        %v675 = vshrl.u32 %v674, 7
        %v676 = vsub.s32 %v673, %v675
        %v677 = vrot.slane %v663, %v676
        %v678 = vcombine.low %v653, %v661
        %v679 = vcombine.high %v653, %v661
        %v681 = vunpack.c.l.s4 1934713408
        %v682 = vunpack.c.0.s8 %v681
        %v683 = vlaneseq
        %v684 = vshrl.u32 %v683, 7
        %v685 = vsub.s32 %v682, %v684
        %v686 = vrot.slane %v678, %v685
        %v688 = vunpack.c.l.s4 1934713408
        %v689 = vunpack.c.0.s8 %v688
        %v690 = vlaneseq
        %v691 = vshrl.u32 %v690, 7
        %v692 = vsub.s32 %v689, %v691
        %v693 = vrot.slane %v679, %v692
        %v694 = vcombine.low %v670, %v686
        %v695 = vcombine.high %v670, %v686
        %v696 = vcombine.low %v677, %v693
        %v697 = vcombine.high %v677, %v693
        %698 = vrot.lane.b32.xlu0 %v549, 96
        %v699 = vpop.permute.xlu0 %698
        %700 = vrot.lane.b32.xlu0 %v554, 96
        %v701 = vpop.permute.xlu0 %700
        %702 = vrot.lane.b32.xlu0 %v557, 96
        %v703 = vpop.permute.xlu0 %702
        %704 = vrot.lane.b32.xlu0 %v560, 96
        %v705 = vpop.permute.xlu0 %704
        %v710 = vcombine.low %v699, %v703
        %v711 = vcombine.high %v699, %v703
        %v713 = vunpack.c.l.s4 1983009808
        %v714 = vunpack.c.0.s8 %v713
        %v715 = vlaneseq
        %v716 = vshrl.u32 %v715, 7
        %v717 = vsub.s32 %v714, %v716
        %v718 = vrot.slane %v710, %v717
        %v720 = vunpack.c.l.s4 1983009808
        %v721 = vunpack.c.0.s8 %v720
        %v722 = vlaneseq
        %v723 = vshrl.u32 %v722, 7
        %v724 = vsub.s32 %v721, %v723
        %v725 = vrot.slane %v711, %v724
        %v726 = vcombine.low %v701, %v705
        %v727 = vcombine.high %v701, %v705
        %v729 = vunpack.c.l.s4 1983009808
        %v730 = vunpack.c.0.s8 %v729
        %v731 = vlaneseq
        %v732 = vshrl.u32 %v731, 7
        %v733 = vsub.s32 %v730, %v732
        %v734 = vrot.slane %v726, %v733
        %v736 = vunpack.c.l.s4 1983009808
        %v737 = vunpack.c.0.s8 %v736
        %v738 = vlaneseq
        %v739 = vshrl.u32 %v738, 7
        %v740 = vsub.s32 %v737, %v739
        %v741 = vrot.slane %v727, %v740
        %v742 = vcombine.low %v718, %v734
        %v743 = vcombine.high %v718, %v734
        %v745 = vunpack.c.l.s4 1934713408
        %v746 = vunpack.c.0.s8 %v745
        %v747 = vlaneseq
        %v748 = vshrl.u32 %v747, 7
        %v749 = vsub.s32 %v746, %v748
        %v750 = vrot.slane %v742, %v749
        %v752 = vunpack.c.l.s4 1934713408
        %v753 = vunpack.c.0.s8 %v752
        %v754 = vlaneseq
        %v755 = vshrl.u32 %v754, 7
        %v756 = vsub.s32 %v753, %v755
        %v757 = vrot.slane %v743, %v756
        %v758 = vcombine.low %v725, %v741
        %v759 = vcombine.high %v725, %v741
        %v761 = vunpack.c.l.s4 1934713408
        %v762 = vunpack.c.0.s8 %v761
        %v763 = vlaneseq
        %v764 = vshrl.u32 %v763, 7
        %v765 = vsub.s32 %v762, %v764
        %v766 = vrot.slane %v758, %v765
        %v768 = vunpack.c.l.s4 1934713408
        %v769 = vunpack.c.0.s8 %v768
        %v770 = vlaneseq
        %v771 = vshrl.u32 %v770, 7
        %v772 = vsub.s32 %v769, %v771
        %v773 = vrot.slane %v759, %v772
        %v774 = vcombine.high %v750, 0.0
        %v775 = vcombine.high %v757, 0.0
        %v776 = vcombine.high %v766, 0.0
        %v777 = vcombine.high %v773, 0.0
        %v778 = vcombine.low %v750, %v757
        %v780 = vunpack.c.l.s4 1983009808
        %v781 = vunpack.c.0.s8 %v780
        %v782 = vlaneseq
        %v783 = vshrl.u32 %v782, 7
        %v784 = vsub.s32 %v781, %v783
        %v785 = vrot.slane %v778, %v784
        %v786 = vcombine.low %v774, %v775
        %v788 = vunpack.c.l.s4 1983009808
        %v789 = vunpack.c.0.s8 %v788
        %v790 = vlaneseq
        %v791 = vshrl.u32 %v790, 7
        %v792 = vsub.s32 %v789, %v791
        %v793 = vrot.slane %v786, %v792
        %v794 = vcombine.low %v766, %v773
        %v796 = vunpack.c.l.s4 1983009808
        %v797 = vunpack.c.0.s8 %v796
        %v798 = vlaneseq
        %v799 = vshrl.u32 %v798, 7
        %v800 = vsub.s32 %v797, %v799
        %v801 = vrot.slane %v794, %v800
        %v802 = vcombine.low %v776, %v777
        %v804 = vunpack.c.l.s4 1983009808
        %v805 = vunpack.c.0.s8 %v804
        %v806 = vlaneseq
        %v807 = vshrl.u32 %v806, 7
        %v808 = vsub.s32 %v805, %v807
        %v809 = vrot.slane %v802, %v808
        %v810 = vcombine.low %v785, %v793
        %v811 = vcombine.high %v785, %v793
        %v813 = vunpack.c.l.s4 1934713408
        %v814 = vunpack.c.0.s8 %v813
        %v815 = vlaneseq
        %v816 = vshrl.u32 %v815, 7
        %v817 = vsub.s32 %v814, %v816
        %v818 = vrot.slane %v810, %v817
        %v820 = vunpack.c.l.s4 1934713408
        %v821 = vunpack.c.0.s8 %v820
        %v822 = vlaneseq
        %v823 = vshrl.u32 %v822, 7
        %v824 = vsub.s32 %v821, %v823
        %v825 = vrot.slane %v811, %v824
        %v826 = vcombine.low %v801, %v809
        %v827 = vcombine.high %v801, %v809
        %v829 = vunpack.c.l.s4 1934713408
        %v830 = vunpack.c.0.s8 %v829
        %v831 = vlaneseq
        %v832 = vshrl.u32 %v831, 7
        %v833 = vsub.s32 %v830, %v832
        %v834 = vrot.slane %v826, %v833
        %v836 = vunpack.c.l.s4 1934713408
        %v837 = vunpack.c.0.s8 %v836
        %v838 = vlaneseq
        %v839 = vshrl.u32 %v838, 7
        %v840 = vsub.s32 %v837, %v839
        %v841 = vrot.slane %v827, %v840
        %v842 = vcombine.low %v818, %v834
        %v843 = vcombine.high %v818, %v834
        %v844 = vcombine.low %v825, %v841
        %v845 = vcombine.high %v825, %v841
        %846 = vrot.lane.b32.xlu0 %v549, 64
        %v847 = vpop.permute.xlu0 %846
        %848 = vrot.lane.b32.xlu0 %v554, 64
        %v849 = vpop.permute.xlu0 %848
        %850 = vrot.lane.b32.xlu0 %v557, 64
        %v851 = vpop.permute.xlu0 %850
        %852 = vrot.lane.b32.xlu0 %v560, 64
        %v853 = vpop.permute.xlu0 %852
        %v858 = vcombine.low %v847, %v851
        %v859 = vcombine.high %v847, %v851
        %v861 = vunpack.c.l.s4 1983009808
        %v862 = vunpack.c.0.s8 %v861
        %v863 = vlaneseq
        %v864 = vshrl.u32 %v863, 7
        %v865 = vsub.s32 %v862, %v864
        %v866 = vrot.slane %v858, %v865
        %v868 = vunpack.c.l.s4 1983009808
        %v869 = vunpack.c.0.s8 %v868
        %v870 = vlaneseq
        %v871 = vshrl.u32 %v870, 7
        %v872 = vsub.s32 %v869, %v871
        %v873 = vrot.slane %v859, %v872
        %v874 = vcombine.low %v849, %v853
        %v875 = vcombine.high %v849, %v853
        %v877 = vunpack.c.l.s4 1983009808
        %v878 = vunpack.c.0.s8 %v877
        %v879 = vlaneseq
        %v880 = vshrl.u32 %v879, 7
        %v881 = vsub.s32 %v878, %v880
        %v882 = vrot.slane %v874, %v881
        %v884 = vunpack.c.l.s4 1983009808
        %v885 = vunpack.c.0.s8 %v884
        %v886 = vlaneseq
        %v887 = vshrl.u32 %v886, 7
        %v888 = vsub.s32 %v885, %v887
        %v889 = vrot.slane %v875, %v888
        %v890 = vcombine.low %v866, %v882
        %v891 = vcombine.high %v866, %v882
        %v893 = vunpack.c.l.s4 1934713408
        %v894 = vunpack.c.0.s8 %v893
        %v895 = vlaneseq
        %v896 = vshrl.u32 %v895, 7
        %v897 = vsub.s32 %v894, %v896
        %v898 = vrot.slane %v890, %v897
        %v900 = vunpack.c.l.s4 1934713408
        %v901 = vunpack.c.0.s8 %v900
        %v902 = vlaneseq
        %v903 = vshrl.u32 %v902, 7
        %v904 = vsub.s32 %v901, %v903
        %v905 = vrot.slane %v891, %v904
        %v906 = vcombine.low %v873, %v889
        %v907 = vcombine.high %v873, %v889
        %v909 = vunpack.c.l.s4 1934713408
        %v910 = vunpack.c.0.s8 %v909
        %v911 = vlaneseq
        %v912 = vshrl.u32 %v911, 7
        %v913 = vsub.s32 %v910, %v912
        %v914 = vrot.slane %v906, %v913
        %v916 = vunpack.c.l.s4 1934713408
        %v917 = vunpack.c.0.s8 %v916
        %v918 = vlaneseq
        %v919 = vshrl.u32 %v918, 7
        %v920 = vsub.s32 %v917, %v919
        %v921 = vrot.slane %v907, %v920
        %v922 = vcombine.high %v898, 0.0
        %v923 = vcombine.high %v905, 0.0
        %v924 = vcombine.high %v914, 0.0
        %v925 = vcombine.high %v921, 0.0
        %v926 = vcombine.low %v898, %v905
        %v928 = vunpack.c.l.s4 1983009808
        %v929 = vunpack.c.0.s8 %v928
        %v930 = vlaneseq
        %v931 = vshrl.u32 %v930, 7
        %v932 = vsub.s32 %v929, %v931
        %v933 = vrot.slane %v926, %v932
        %v934 = vcombine.low %v922, %v923
        %v936 = vunpack.c.l.s4 1983009808
        %v937 = vunpack.c.0.s8 %v936
        %v938 = vlaneseq
        %v939 = vshrl.u32 %v938, 7
        %v940 = vsub.s32 %v937, %v939
        %v941 = vrot.slane %v934, %v940
        %v942 = vcombine.low %v914, %v921
        %v944 = vunpack.c.l.s4 1983009808
        %v945 = vunpack.c.0.s8 %v944
        %v946 = vlaneseq
        %v947 = vshrl.u32 %v946, 7
        %v948 = vsub.s32 %v945, %v947
        %v949 = vrot.slane %v942, %v948
        %v950 = vcombine.low %v924, %v925
        %v952 = vunpack.c.l.s4 1983009808
        %v953 = vunpack.c.0.s8 %v952
        %v954 = vlaneseq
        %v955 = vshrl.u32 %v954, 7
        %v956 = vsub.s32 %v953, %v955
        %v957 = vrot.slane %v950, %v956
        %v958 = vcombine.low %v933, %v941
        %v959 = vcombine.high %v933, %v941
        %v961 = vunpack.c.l.s4 1934713408
        %v962 = vunpack.c.0.s8 %v961
        %v963 = vlaneseq
        %v964 = vshrl.u32 %v963, 7
        %v965 = vsub.s32 %v962, %v964
        %v966 = vrot.slane %v958, %v965
        %v968 = vunpack.c.l.s4 1934713408
        %v969 = vunpack.c.0.s8 %v968
        %v970 = vlaneseq
        %v971 = vshrl.u32 %v970, 7
        %v972 = vsub.s32 %v969, %v971
        %v973 = vrot.slane %v959, %v972
        %v974 = vcombine.low %v949, %v957
        %v975 = vcombine.high %v949, %v957
        %v977 = vunpack.c.l.s4 1934713408
        %v978 = vunpack.c.0.s8 %v977
        %v979 = vlaneseq
        %v980 = vshrl.u32 %v979, 7
        %v981 = vsub.s32 %v978, %v980
        %v982 = vrot.slane %v974, %v981
        %v984 = vunpack.c.l.s4 1934713408
        %v985 = vunpack.c.0.s8 %v984
        %v986 = vlaneseq
        %v987 = vshrl.u32 %v986, 7
        %v988 = vsub.s32 %v985, %v987
        %v989 = vrot.slane %v975, %v988
        %v990 = vcombine.low %v966, %v982
        %v991 = vcombine.high %v966, %v982
        %v992 = vcombine.low %v973, %v989
        %v993 = vcombine.high %v973, %v989
        %vm994 = vcmask 64512
        %v996 = vsel %vm994, %v694, 0
        %v999 = vsel %vm994, %v842, 0
        %1001 = vmatprep.subr.mxu0 0.0
        %1002 = vmatpush1.xpose.msra.mxu0 0.0
        %1003 = vmatprep.subr.mxu0 0.0
        %1004 = vmatpush1.xpose.msra.mxu0 0.0
        %1005 = vmatprep.subr.mxu0 0.0
        %1006 = vmatpush1.xpose.msra.mxu0 0.0
        %1007 = vmatprep.subr.mxu0 0.0
        %1008 = vmatpush1.xpose.msra.mxu0 0.0
        %1009 = vmatprep.subr.mxu0 0.0
        %1010 = vmatpush1.xpose.msra.mxu0 0.0
        %1011 = vmatprep.subr.mxu0 0.0
        %1012 = vmatpush1.xpose.msra.mxu0 0.0
        %1013 = vmatprep.subr.mxu0 0.0
        %1014 = vmatpush1.xpose.msra.mxu0 0.0
        %1015 = vmatprep.subr.mxu0 0.0
        %1016 = vmatpush1.xpose.msra.mxu0 0.0
        %1017 = vmatprep.subr.mxu0 0.0
        %1018 = vmatpush1.xpose.msra.mxu0 0.0
        %1019 = vmatprep.subr.mxu0 0.0
        %1020 = vmatpush1.xpose.msra.mxu0 0.0
        %1021 = vmatprep.subr.mxu0 0.0
        %1022 = vmatpush1.xpose.msra.mxu0 0.0
        %1023 = vmatprep.subr.mxu0 0.0
        %1024 = vmatpush1.xpose.msra.mxu0 0.0
        %1025 = vmatprep.subr.mxu0 0.0
        %1026 = vmatpush1.xpose.msra.mxu0 0.0
        %1027 = vmatprep.subr.mxu0 0.0
        %1028 = vmatpush1.xpose.msra.mxu0 0.0
        %1029 = vmatprep.subr.mxu0 0.0
        %1030 = vmatpush1.xpose.msra.mxu0 0.0
        %1031 = vmatprep.subr.mxu0 0.0
        %1032 = vmatpush1.xpose.msra.mxu0 %v999
        %1033 = vmatprep.subr.mxu0 0.0
        %1034 = vmatpush2.xpose.msra.mxu0 0.0
        %1035 = vmatprep.subr.mxu0 0.0
        %1036 = vmatpush2.xpose.msra.mxu0 0.0
        %1037 = vmatprep.subr.mxu0 0.0
        %1038 = vmatpush2.xpose.msra.mxu0 0.0
        %1039 = vmatprep.subr.mxu0 0.0
        %1040 = vmatpush2.xpose.msra.mxu0 0.0
        %1041 = vmatprep.subr.mxu0 0.0
        %1042 = vmatpush2.xpose.msra.mxu0 0.0
        %1043 = vmatprep.subr.mxu0 0.0
        %1044 = vmatpush2.xpose.msra.mxu0 0.0
        %1045 = vmatprep.subr.mxu0 0.0
        %1046 = vmatpush2.xpose.msra.mxu0 0.0
        %1047 = vmatprep.subr.mxu0 0.0
        %1048 = vmatpush2.xpose.msra.mxu0 0.0
        %1049 = vmatprep.subr.mxu0 0.0
        %1050 = vmatpush2.xpose.msra.mxu0 0.0
        %1051 = vmatprep.subr.mxu0 0.0
        %1052 = vmatpush2.xpose.msra.mxu0 0.0
        %1053 = vmatprep.subr.mxu0 0.0
        %1054 = vmatpush2.xpose.msra.mxu0 0.0
        %1055 = vmatprep.subr.mxu0 0.0
        %1056 = vmatpush2.xpose.msra.mxu0 0.0
        %1057 = vmatprep.subr.mxu0 0.0
        %1058 = vmatpush2.xpose.msra.mxu0 0.0
        %1059 = vmatprep.subr.mxu0 0.0
        %1060 = vmatpush2.xpose.msra.mxu0 0.0
        %1061 = vmatprep.subr.mxu0 0.0
        %1062 = vmatpush2.xpose.msra.mxu0 0.0
        %1063 = vmatprep.subr.mxu0 0.0
        %1064 = vmatpush2.xpose.msra.mxu0 0.0
        %1065 = vmatprep.mubr.f32.mxu0 0.0
        %1066 = vmatmul.mubr.f32.gmra.mxu0 %v996
        %v1067 = vpop.f32.mrf.mxu0
        %v1068 = vadd.f32 0.0, %v1067
        %v1069 = vpop.f32.mrf.mxu0
        %1070 = vdwg.mxu0
        %v1072 = vsel %vm994, %v695, 0
        %v1075 = vsel %vm994, %v843, 0
        %1077 = vmatprep.subr.mxu0 0.0
        %1078 = vmatpush1.xpose.msra.mxu0 0.0
        %1079 = vmatprep.subr.mxu0 0.0
        %1080 = vmatpush1.xpose.msra.mxu0 0.0
        %1081 = vmatprep.subr.mxu0 0.0
        %1082 = vmatpush1.xpose.msra.mxu0 0.0
        %1083 = vmatprep.subr.mxu0 0.0
        %1084 = vmatpush1.xpose.msra.mxu0 0.0
        %1085 = vmatprep.subr.mxu0 0.0
        %1086 = vmatpush1.xpose.msra.mxu0 0.0
        %1087 = vmatprep.subr.mxu0 0.0
        %1088 = vmatpush1.xpose.msra.mxu0 0.0
        %1089 = vmatprep.subr.mxu0 0.0
        %1090 = vmatpush1.xpose.msra.mxu0 0.0
        %1091 = vmatprep.subr.mxu0 0.0
        %1092 = vmatpush1.xpose.msra.mxu0 0.0
        %1093 = vmatprep.subr.mxu0 0.0
        %1094 = vmatpush1.xpose.msra.mxu0 0.0
        %1095 = vmatprep.subr.mxu0 0.0
        %1096 = vmatpush1.xpose.msra.mxu0 0.0
        %1097 = vmatprep.subr.mxu0 0.0
        %1098 = vmatpush1.xpose.msra.mxu0 0.0
        %1099 = vmatprep.subr.mxu0 0.0
        %1100 = vmatpush1.xpose.msra.mxu0 0.0
        %1101 = vmatprep.subr.mxu0 0.0
        %1102 = vmatpush1.xpose.msra.mxu0 0.0
        %1103 = vmatprep.subr.mxu0 0.0
        %1104 = vmatpush1.xpose.msra.mxu0 0.0
        %1105 = vmatprep.subr.mxu0 0.0
        %1106 = vmatpush1.xpose.msra.mxu0 0.0
        %1107 = vmatprep.subr.mxu0 0.0
        %1108 = vmatpush1.xpose.msra.mxu0 %v1075
        %1109 = vmatprep.subr.mxu0 0.0
        %1110 = vmatpush2.xpose.msra.mxu0 0.0
        %1111 = vmatprep.subr.mxu0 0.0
        %1112 = vmatpush2.xpose.msra.mxu0 0.0
        %1113 = vmatprep.subr.mxu0 0.0
        %1114 = vmatpush2.xpose.msra.mxu0 0.0
        %1115 = vmatprep.subr.mxu0 0.0
        %1116 = vmatpush2.xpose.msra.mxu0 0.0
        %1117 = vmatprep.subr.mxu0 0.0
        %1118 = vmatpush2.xpose.msra.mxu0 0.0
        %1119 = vmatprep.subr.mxu0 0.0
        %1120 = vmatpush2.xpose.msra.mxu0 0.0
        %1121 = vmatprep.subr.mxu0 0.0
        %1122 = vmatpush2.xpose.msra.mxu0 0.0
        %1123 = vmatprep.subr.mxu0 0.0
        %1124 = vmatpush2.xpose.msra.mxu0 0.0
        %1125 = vmatprep.subr.mxu0 0.0
        %1126 = vmatpush2.xpose.msra.mxu0 0.0
        %1127 = vmatprep.subr.mxu0 0.0
        %1128 = vmatpush2.xpose.msra.mxu0 0.0
        %1129 = vmatprep.subr.mxu0 0.0
        %1130 = vmatpush2.xpose.msra.mxu0 0.0
        %1131 = vmatprep.subr.mxu0 0.0
        %1132 = vmatpush2.xpose.msra.mxu0 0.0
        %1133 = vmatprep.subr.mxu0 0.0
        %1134 = vmatpush2.xpose.msra.mxu0 0.0
        %1135 = vmatprep.subr.mxu0 0.0
        %1136 = vmatpush2.xpose.msra.mxu0 0.0
        %1137 = vmatprep.subr.mxu0 0.0
        %1138 = vmatpush2.xpose.msra.mxu0 0.0
        %1139 = vmatprep.subr.mxu0 0.0
        %1140 = vmatpush2.xpose.msra.mxu0 0.0
        %1141 = vmatprep.mubr.f32.mxu0 0.0
        %1142 = vmatmul.mubr.f32.gmra.mxu0 %v1072
        %v1143 = vpop.f32.mrf.mxu0
        %v1144 = vadd.f32 0.0, %v1143
        %v1145 = vpop.f32.mrf.mxu0
        %1146 = vdwg.mxu0
        %v1148 = vsel %vm994, %v696, 0
        %v1151 = vsel %vm994, %v844, 0
        %1153 = vmatprep.subr.mxu0 0.0
        %1154 = vmatpush1.xpose.msra.mxu0 0.0
        %1155 = vmatprep.subr.mxu0 0.0
        %1156 = vmatpush1.xpose.msra.mxu0 0.0
        %1157 = vmatprep.subr.mxu0 0.0
        %1158 = vmatpush1.xpose.msra.mxu0 0.0
        %1159 = vmatprep.subr.mxu0 0.0
        %1160 = vmatpush1.xpose.msra.mxu0 0.0
        %1161 = vmatprep.subr.mxu0 0.0
        %1162 = vmatpush1.xpose.msra.mxu0 0.0
        %1163 = vmatprep.subr.mxu0 0.0
        %1164 = vmatpush1.xpose.msra.mxu0 0.0
        %1165 = vmatprep.subr.mxu0 0.0
        %1166 = vmatpush1.xpose.msra.mxu0 0.0
        %1167 = vmatprep.subr.mxu0 0.0
        %1168 = vmatpush1.xpose.msra.mxu0 0.0
        %1169 = vmatprep.subr.mxu0 0.0
        %1170 = vmatpush1.xpose.msra.mxu0 0.0
        %1171 = vmatprep.subr.mxu0 0.0
        %1172 = vmatpush1.xpose.msra.mxu0 0.0
        %1173 = vmatprep.subr.mxu0 0.0
        %1174 = vmatpush1.xpose.msra.mxu0 0.0
        %1175 = vmatprep.subr.mxu0 0.0
        %1176 = vmatpush1.xpose.msra.mxu0 0.0
        %1177 = vmatprep.subr.mxu0 0.0
        %1178 = vmatpush1.xpose.msra.mxu0 0.0
        %1179 = vmatprep.subr.mxu0 0.0
        %1180 = vmatpush1.xpose.msra.mxu0 0.0
        %1181 = vmatprep.subr.mxu0 0.0
        %1182 = vmatpush1.xpose.msra.mxu0 0.0
        %1183 = vmatprep.subr.mxu0 0.0
        %1184 = vmatpush1.xpose.msra.mxu0 %v1151
        %1185 = vmatprep.subr.mxu0 0.0
        %1186 = vmatpush2.xpose.msra.mxu0 0.0
        %1187 = vmatprep.subr.mxu0 0.0
        %1188 = vmatpush2.xpose.msra.mxu0 0.0
        %1189 = vmatprep.subr.mxu0 0.0
        %1190 = vmatpush2.xpose.msra.mxu0 0.0
        %1191 = vmatprep.subr.mxu0 0.0
        %1192 = vmatpush2.xpose.msra.mxu0 0.0
        %1193 = vmatprep.subr.mxu0 0.0
        %1194 = vmatpush2.xpose.msra.mxu0 0.0
        %1195 = vmatprep.subr.mxu0 0.0
        %1196 = vmatpush2.xpose.msra.mxu0 0.0
        %1197 = vmatprep.subr.mxu0 0.0
        %1198 = vmatpush2.xpose.msra.mxu0 0.0
        %1199 = vmatprep.subr.mxu0 0.0
        %1200 = vmatpush2.xpose.msra.mxu0 0.0
        %1201 = vmatprep.subr.mxu0 0.0
        %1202 = vmatpush2.xpose.msra.mxu0 0.0
        %1203 = vmatprep.subr.mxu0 0.0
        %1204 = vmatpush2.xpose.msra.mxu0 0.0
        %1205 = vmatprep.subr.mxu0 0.0
        %1206 = vmatpush2.xpose.msra.mxu0 0.0
        %1207 = vmatprep.subr.mxu0 0.0
        %1208 = vmatpush2.xpose.msra.mxu0 0.0
        %1209 = vmatprep.subr.mxu0 0.0
        %1210 = vmatpush2.xpose.msra.mxu0 0.0
        %1211 = vmatprep.subr.mxu0 0.0
        %1212 = vmatpush2.xpose.msra.mxu0 0.0
        %1213 = vmatprep.subr.mxu0 0.0
        %1214 = vmatpush2.xpose.msra.mxu0 0.0
        %1215 = vmatprep.subr.mxu0 0.0
        %1216 = vmatpush2.xpose.msra.mxu0 0.0
        %1217 = vmatprep.mubr.f32.mxu0 0.0
        %1218 = vmatmul.mubr.f32.gmra.mxu0 %v1148
        %v1219 = vpop.f32.mrf.mxu0
        %v1220 = vadd.f32 0.0, %v1219
        %v1221 = vpop.f32.mrf.mxu0
        %1222 = vdwg.mxu0
        %v1224 = vsel %vm994, %v697, 0
        %v1227 = vsel %vm994, %v845, 0
        %1229 = vmatprep.subr.mxu0 0.0
        %1230 = vmatpush1.xpose.msra.mxu0 0.0
        %1231 = vmatprep.subr.mxu0 0.0
        %1232 = vmatpush1.xpose.msra.mxu0 0.0
        %1233 = vmatprep.subr.mxu0 0.0
        %1234 = vmatpush1.xpose.msra.mxu0 0.0
        %1235 = vmatprep.subr.mxu0 0.0
        %1236 = vmatpush1.xpose.msra.mxu0 0.0
        %1237 = vmatprep.subr.mxu0 0.0
        %1238 = vmatpush1.xpose.msra.mxu0 0.0
        %1239 = vmatprep.subr.mxu0 0.0
        %1240 = vmatpush1.xpose.msra.mxu0 0.0
        %1241 = vmatprep.subr.mxu0 0.0
        %1242 = vmatpush1.xpose.msra.mxu0 0.0
        %1243 = vmatprep.subr.mxu0 0.0
        %1244 = vmatpush1.xpose.msra.mxu0 0.0
        %1245 = vmatprep.subr.mxu0 0.0
        %1246 = vmatpush1.xpose.msra.mxu0 0.0
        %1247 = vmatprep.subr.mxu0 0.0
        %1248 = vmatpush1.xpose.msra.mxu0 0.0
        %1249 = vmatprep.subr.mxu0 0.0
        %1250 = vmatpush1.xpose.msra.mxu0 0.0
        %1251 = vmatprep.subr.mxu0 0.0
        %1252 = vmatpush1.xpose.msra.mxu0 0.0
        %1253 = vmatprep.subr.mxu0 0.0
        %1254 = vmatpush1.xpose.msra.mxu0 0.0
        %1255 = vmatprep.subr.mxu0 0.0
        %1256 = vmatpush1.xpose.msra.mxu0 0.0
        %1257 = vmatprep.subr.mxu0 0.0
        %1258 = vmatpush1.xpose.msra.mxu0 0.0
        %1259 = vmatprep.subr.mxu0 0.0
        %1260 = vmatpush1.xpose.msra.mxu0 %v1227
        %1261 = vmatprep.subr.mxu0 0.0
        %1262 = vmatpush2.xpose.msra.mxu0 0.0
        %1263 = vmatprep.subr.mxu0 0.0
        %1264 = vmatpush2.xpose.msra.mxu0 0.0
        %1265 = vmatprep.subr.mxu0 0.0
        %1266 = vmatpush2.xpose.msra.mxu0 0.0
        %1267 = vmatprep.subr.mxu0 0.0
        %1268 = vmatpush2.xpose.msra.mxu0 0.0
        %1269 = vmatprep.subr.mxu0 0.0
        %1270 = vmatpush2.xpose.msra.mxu0 0.0
        %1271 = vmatprep.subr.mxu0 0.0
        %1272 = vmatpush2.xpose.msra.mxu0 0.0
        %1273 = vmatprep.subr.mxu0 0.0
        %1274 = vmatpush2.xpose.msra.mxu0 0.0
        %1275 = vmatprep.subr.mxu0 0.0
        %1276 = vmatpush2.xpose.msra.mxu0 0.0
        %1277 = vmatprep.subr.mxu0 0.0
        %1278 = vmatpush2.xpose.msra.mxu0 0.0
        %1279 = vmatprep.subr.mxu0 0.0
        %1280 = vmatpush2.xpose.msra.mxu0 0.0
        %1281 = vmatprep.subr.mxu0 0.0
        %1282 = vmatpush2.xpose.msra.mxu0 0.0
        %1283 = vmatprep.subr.mxu0 0.0
        %1284 = vmatpush2.xpose.msra.mxu0 0.0
        %1285 = vmatprep.subr.mxu0 0.0
        %1286 = vmatpush2.xpose.msra.mxu0 0.0
        %1287 = vmatprep.subr.mxu0 0.0
        %1288 = vmatpush2.xpose.msra.mxu0 0.0
        %1289 = vmatprep.subr.mxu0 0.0
        %1290 = vmatpush2.xpose.msra.mxu0 0.0
        %1291 = vmatprep.subr.mxu0 0.0
        %1292 = vmatpush2.xpose.msra.mxu0 0.0
        %1293 = vmatprep.mubr.f32.mxu0 0.0
        %1294 = vmatmul.mubr.f32.gmra.mxu0 %v1224
        %v1295 = vpop.f32.mrf.mxu0
        %v1296 = vadd.f32 0.0, %v1295
        %v1297 = vpop.f32.mrf.mxu0
        %1298 = vdwg.mxu0
        %v1299 = vsel %vm994, %v1068, -inf
        %1300 = vmax.xlane.f32.xlu0 %v1299
        %v1301 = vpop.xlane.xlu0 %1300
        %v1302 = vsel %vm994, %v1144, -inf
        %1303 = vmax.xlane.f32.xlu0 %v1302
        %v1304 = vpop.xlane.xlu0 %1303
        %v1305 = vsel %vm994, %v1220, -inf
        %1306 = vmax.xlane.f32.xlu0 %v1305
        %v1307 = vpop.xlane.xlu0 %1306
        %v1308 = vsel %vm994, %v1296, -inf
        %1309 = vmax.xlane.f32.xlu0 %v1308
        %v1310 = vpop.xlane.xlu0 %1309
        %v1311 = vsub.f32 %v1068, %v1301
        %v1312 = vsub.f32 %v1144, %v1304
        %v1313 = vsub.f32 %v1220, %v1307
        %v1314 = vsub.f32 %v1296, %v1310
        %v1315 = vmul.f32 %v1311, 1.442695
        %v1316 = vpow.pop %v1315
        %v1317 = vmul.f32 %v1312, 1.442695
        %v1318 = vpow.pop %v1317
        %v1319 = vmul.f32 %v1313, 1.442695
        %v1320 = vpow.pop %v1319
        %v1321 = vmul.f32 %v1314, 1.442695
        %v1322 = vpow.pop %v1321
        %v1323 = vsel %vm994, %v1316, 0.0
        %1324 = vadd.xlane.f32.xlu0 %v1323
        %v1325 = vpop.xlane.xlu0 %1324
        %v1326 = vsel %vm994, %v1318, 0.0
        %1327 = vadd.xlane.f32.xlu0 %v1326
        %v1328 = vpop.xlane.xlu0 %1327
        %v1329 = vsel %vm994, %v1320, 0.0
        %1330 = vadd.xlane.f32.xlu0 %v1329
        %v1331 = vpop.xlane.xlu0 %1330
        %v1332 = vsel %vm994, %v1322, 0.0
        %1333 = vadd.xlane.f32.xlu0 %v1332
        %v1334 = vpop.xlane.xlu0 %1333
        %v1336 = vsel %vm994, %v1316, 0
        %1338 = vmatprep.subr.mxu0 0.0
        %1339 = vmatpush1.msra.mxu0 0.0
        %1340 = vmatprep.subr.mxu0 0.0
        %1341 = vmatpush1.msra.mxu0 0.0
        %1342 = vmatprep.subr.mxu0 0.0
        %1343 = vmatpush1.msra.mxu0 0.0
        %1344 = vmatprep.subr.mxu0 0.0
        %1345 = vmatpush1.msra.mxu0 0.0
        %1346 = vmatprep.subr.mxu0 0.0
        %1347 = vmatpush1.msra.mxu0 0.0
        %1348 = vmatprep.subr.mxu0 0.0
        %1349 = vmatpush1.msra.mxu0 0.0
        %1350 = vmatprep.subr.mxu0 0.0
        %1351 = vmatpush1.msra.mxu0 0.0
        %1352 = vmatprep.subr.mxu0 0.0
        %1353 = vmatpush1.msra.mxu0 0.0
        %1354 = vmatprep.subr.mxu0 0.0
        %1355 = vmatpush1.msra.mxu0 0.0
        %1356 = vmatprep.subr.mxu0 0.0
        %1357 = vmatpush1.msra.mxu0 0.0
        %1358 = vmatprep.subr.mxu0 0.0
        %1359 = vmatpush1.msra.mxu0 0.0
        %1360 = vmatprep.subr.mxu0 0.0
        %1361 = vmatpush1.msra.mxu0 0.0
        %1362 = vmatprep.subr.mxu0 0.0
        %1363 = vmatpush1.msra.mxu0 0.0
        %1364 = vmatprep.subr.mxu0 0.0
        %1365 = vmatpush1.msra.mxu0 0.0
        %1366 = vmatprep.subr.mxu0 0.0
        %1367 = vmatpush1.msra.mxu0 0.0
        %1368 = vmatprep.subr.mxu0 0.0
        %1369 = vmatpush1.msra.mxu0 %v990
        %1370 = vmatprep.subr.mxu0 0.0
        %1371 = vmatpush2.msra.mxu0 0.0
        %1372 = vmatprep.subr.mxu0 0.0
        %1373 = vmatpush2.msra.mxu0 0.0
        %1374 = vmatprep.subr.mxu0 0.0
        %1375 = vmatpush2.msra.mxu0 0.0
        %1376 = vmatprep.subr.mxu0 0.0
        %1377 = vmatpush2.msra.mxu0 0.0
        %1378 = vmatprep.subr.mxu0 0.0
        %1379 = vmatpush2.msra.mxu0 0.0
        %1380 = vmatprep.subr.mxu0 0.0
        %1381 = vmatpush2.msra.mxu0 0.0
        %1382 = vmatprep.subr.mxu0 0.0
        %1383 = vmatpush2.msra.mxu0 0.0
        %1384 = vmatprep.subr.mxu0 0.0
        %1385 = vmatpush2.msra.mxu0 0.0
        %1386 = vmatprep.subr.mxu0 0.0
        %1387 = vmatpush2.msra.mxu0 0.0
        %1388 = vmatprep.subr.mxu0 0.0
        %1389 = vmatpush2.msra.mxu0 0.0
        %1390 = vmatprep.subr.mxu0 0.0
        %1391 = vmatpush2.msra.mxu0 0.0
        %1392 = vmatprep.subr.mxu0 0.0
        %1393 = vmatpush2.msra.mxu0 0.0
        %1394 = vmatprep.subr.mxu0 0.0
        %1395 = vmatpush2.msra.mxu0 0.0
        %1396 = vmatprep.subr.mxu0 0.0
        %1397 = vmatpush2.msra.mxu0 0.0
        %1398 = vmatprep.subr.mxu0 0.0
        %1399 = vmatpush2.msra.mxu0 0.0
        %1400 = vmatprep.subr.mxu0 0.0
        %1401 = vmatpush2.msra.mxu0 0.0
        %1402 = vmatprep.mubr.f32.mxu0 0.0
        %1403 = vmatmul.mubr.f32.gmra.mxu0 %v1336
        %v1404 = vpop.f32.mrf.mxu0
        %v1405 = vadd.f32 0.0, %v1404
        %v1406 = vpop.f32.mrf.mxu0
        %1407 = vdwg.mxu0
        %v1409 = vsel %vm994, %v1318, 0
        %1411 = vmatprep.subr.mxu0 0.0
        %1412 = vmatpush1.msra.mxu0 0.0
        %1413 = vmatprep.subr.mxu0 0.0
        %1414 = vmatpush1.msra.mxu0 0.0
        %1415 = vmatprep.subr.mxu0 0.0
        %1416 = vmatpush1.msra.mxu0 0.0
        %1417 = vmatprep.subr.mxu0 0.0
        %1418 = vmatpush1.msra.mxu0 0.0
        %1419 = vmatprep.subr.mxu0 0.0
        %1420 = vmatpush1.msra.mxu0 0.0
        %1421 = vmatprep.subr.mxu0 0.0
        %1422 = vmatpush1.msra.mxu0 0.0
        %1423 = vmatprep.subr.mxu0 0.0
        %1424 = vmatpush1.msra.mxu0 0.0
        %1425 = vmatprep.subr.mxu0 0.0
        %1426 = vmatpush1.msra.mxu0 0.0
        %1427 = vmatprep.subr.mxu0 0.0
        %1428 = vmatpush1.msra.mxu0 0.0
        %1429 = vmatprep.subr.mxu0 0.0
        %1430 = vmatpush1.msra.mxu0 0.0
        %1431 = vmatprep.subr.mxu0 0.0
        %1432 = vmatpush1.msra.mxu0 0.0
        %1433 = vmatprep.subr.mxu0 0.0
        %1434 = vmatpush1.msra.mxu0 0.0
        %1435 = vmatprep.subr.mxu0 0.0
        %1436 = vmatpush1.msra.mxu0 0.0
        %1437 = vmatprep.subr.mxu0 0.0
        %1438 = vmatpush1.msra.mxu0 0.0
        %1439 = vmatprep.subr.mxu0 0.0
        %1440 = vmatpush1.msra.mxu0 0.0
        %1441 = vmatprep.subr.mxu0 0.0
        %1442 = vmatpush1.msra.mxu0 %v991
        %1443 = vmatprep.subr.mxu0 0.0
        %1444 = vmatpush2.msra.mxu0 0.0
        %1445 = vmatprep.subr.mxu0 0.0
        %1446 = vmatpush2.msra.mxu0 0.0
        %1447 = vmatprep.subr.mxu0 0.0
        %1448 = vmatpush2.msra.mxu0 0.0
        %1449 = vmatprep.subr.mxu0 0.0
        %1450 = vmatpush2.msra.mxu0 0.0
        %1451 = vmatprep.subr.mxu0 0.0
        %1452 = vmatpush2.msra.mxu0 0.0
        %1453 = vmatprep.subr.mxu0 0.0
        %1454 = vmatpush2.msra.mxu0 0.0
        %1455 = vmatprep.subr.mxu0 0.0
        %1456 = vmatpush2.msra.mxu0 0.0
        %1457 = vmatprep.subr.mxu0 0.0
        %1458 = vmatpush2.msra.mxu0 0.0
        %1459 = vmatprep.subr.mxu0 0.0
        %1460 = vmatpush2.msra.mxu0 0.0
        %1461 = vmatprep.subr.mxu0 0.0
        %1462 = vmatpush2.msra.mxu0 0.0
        %1463 = vmatprep.subr.mxu0 0.0
        %1464 = vmatpush2.msra.mxu0 0.0
        %1465 = vmatprep.subr.mxu0 0.0
        %1466 = vmatpush2.msra.mxu0 0.0
        %1467 = vmatprep.subr.mxu0 0.0
        %1468 = vmatpush2.msra.mxu0 0.0
        %1469 = vmatprep.subr.mxu0 0.0
        %1470 = vmatpush2.msra.mxu0 0.0
        %1471 = vmatprep.subr.mxu0 0.0
        %1472 = vmatpush2.msra.mxu0 0.0
        %1473 = vmatprep.subr.mxu0 0.0
        %1474 = vmatpush2.msra.mxu0 0.0
        %1475 = vmatprep.mubr.f32.mxu0 0.0
        %1476 = vmatmul.mubr.f32.gmra.mxu0 %v1409
        %v1477 = vpop.f32.mrf.mxu0
        %v1478 = vadd.f32 0.0, %v1477
        %v1479 = vpop.f32.mrf.mxu0
        %1480 = vdwg.mxu0
        %v1482 = vsel %vm994, %v1320, 0
        %1484 = vmatprep.subr.mxu0 0.0
        %1485 = vmatpush1.msra.mxu0 0.0
        %1486 = vmatprep.subr.mxu0 0.0
        %1487 = vmatpush1.msra.mxu0 0.0
        %1488 = vmatprep.subr.mxu0 0.0
        %1489 = vmatpush1.msra.mxu0 0.0
        %1490 = vmatprep.subr.mxu0 0.0
        %1491 = vmatpush1.msra.mxu0 0.0
        %1492 = vmatprep.subr.mxu0 0.0
        %1493 = vmatpush1.msra.mxu0 0.0
        %1494 = vmatprep.subr.mxu0 0.0
        %1495 = vmatpush1.msra.mxu0 0.0
        %1496 = vmatprep.subr.mxu0 0.0
        %1497 = vmatpush1.msra.mxu0 0.0
        %1498 = vmatprep.subr.mxu0 0.0
        %1499 = vmatpush1.msra.mxu0 0.0
        %1500 = vmatprep.subr.mxu0 0.0
        %1501 = vmatpush1.msra.mxu0 0.0
        %1502 = vmatprep.subr.mxu0 0.0
        %1503 = vmatpush1.msra.mxu0 0.0
        %1504 = vmatprep.subr.mxu0 0.0
        %1505 = vmatpush1.msra.mxu0 0.0
        %1506 = vmatprep.subr.mxu0 0.0
        %1507 = vmatpush1.msra.mxu0 0.0
        %1508 = vmatprep.subr.mxu0 0.0
        %1509 = vmatpush1.msra.mxu0 0.0
        %1510 = vmatprep.subr.mxu0 0.0
        %1511 = vmatpush1.msra.mxu0 0.0
        %1512 = vmatprep.subr.mxu0 0.0
        %1513 = vmatpush1.msra.mxu0 0.0
        %1514 = vmatprep.subr.mxu0 0.0
        %1515 = vmatpush1.msra.mxu0 %v992
        %1516 = vmatprep.subr.mxu0 0.0
        %1517 = vmatpush2.msra.mxu0 0.0
        %1518 = vmatprep.subr.mxu0 0.0
        %1519 = vmatpush2.msra.mxu0 0.0
        %1520 = vmatprep.subr.mxu0 0.0
        %1521 = vmatpush2.msra.mxu0 0.0
        %1522 = vmatprep.subr.mxu0 0.0
        %1523 = vmatpush2.msra.mxu0 0.0
        %1524 = vmatprep.subr.mxu0 0.0
        %1525 = vmatpush2.msra.mxu0 0.0
        %1526 = vmatprep.subr.mxu0 0.0
        %1527 = vmatpush2.msra.mxu0 0.0
        %1528 = vmatprep.subr.mxu0 0.0
        %1529 = vmatpush2.msra.mxu0 0.0
        %1530 = vmatprep.subr.mxu0 0.0
        %1531 = vmatpush2.msra.mxu0 0.0
        %1532 = vmatprep.subr.mxu0 0.0
        %1533 = vmatpush2.msra.mxu0 0.0
        %1534 = vmatprep.subr.mxu0 0.0
        %1535 = vmatpush2.msra.mxu0 0.0
        %1536 = vmatprep.subr.mxu0 0.0
        %1537 = vmatpush2.msra.mxu0 0.0
        %1538 = vmatprep.subr.mxu0 0.0
        %1539 = vmatpush2.msra.mxu0 0.0
        %1540 = vmatprep.subr.mxu0 0.0
        %1541 = vmatpush2.msra.mxu0 0.0
        %1542 = vmatprep.subr.mxu0 0.0
        %1543 = vmatpush2.msra.mxu0 0.0
        %1544 = vmatprep.subr.mxu0 0.0
        %1545 = vmatpush2.msra.mxu0 0.0
        %1546 = vmatprep.subr.mxu0 0.0
        %1547 = vmatpush2.msra.mxu0 0.0
        %1548 = vmatprep.mubr.f32.mxu0 0.0
        %1549 = vmatmul.mubr.f32.gmra.mxu0 %v1482
        %v1550 = vpop.f32.mrf.mxu0
        %v1551 = vadd.f32 0.0, %v1550
        %v1552 = vpop.f32.mrf.mxu0
        %1553 = vdwg.mxu0
        %v1555 = vsel %vm994, %v1322, 0
        %1557 = vmatprep.subr.mxu0 0.0
        %1558 = vmatpush1.msra.mxu0 0.0
        %1559 = vmatprep.subr.mxu0 0.0
        %1560 = vmatpush1.msra.mxu0 0.0
        %1561 = vmatprep.subr.mxu0 0.0
        %1562 = vmatpush1.msra.mxu0 0.0
        %1563 = vmatprep.subr.mxu0 0.0
        %1564 = vmatpush1.msra.mxu0 0.0
        %1565 = vmatprep.subr.mxu0 0.0
        %1566 = vmatpush1.msra.mxu0 0.0
        %1567 = vmatprep.subr.mxu0 0.0
        %1568 = vmatpush1.msra.mxu0 0.0
        %1569 = vmatprep.subr.mxu0 0.0
        %1570 = vmatpush1.msra.mxu0 0.0
        %1571 = vmatprep.subr.mxu0 0.0
        %1572 = vmatpush1.msra.mxu0 0.0
        %1573 = vmatprep.subr.mxu0 0.0
        %1574 = vmatpush1.msra.mxu0 0.0
        %1575 = vmatprep.subr.mxu0 0.0
        %1576 = vmatpush1.msra.mxu0 0.0
        %1577 = vmatprep.subr.mxu0 0.0
        %1578 = vmatpush1.msra.mxu0 0.0
        %1579 = vmatprep.subr.mxu0 0.0
        %1580 = vmatpush1.msra.mxu0 0.0
        %1581 = vmatprep.subr.mxu0 0.0
        %1582 = vmatpush1.msra.mxu0 0.0
        %1583 = vmatprep.subr.mxu0 0.0
        %1584 = vmatpush1.msra.mxu0 0.0
        %1585 = vmatprep.subr.mxu0 0.0
        %1586 = vmatpush1.msra.mxu0 0.0
        %1587 = vmatprep.subr.mxu0 0.0
        %1588 = vmatpush1.msra.mxu0 %v993
        %1589 = vmatprep.subr.mxu0 0.0
        %1590 = vmatpush2.msra.mxu0 0.0
        %1591 = vmatprep.subr.mxu0 0.0
        %1592 = vmatpush2.msra.mxu0 0.0
        %1593 = vmatprep.subr.mxu0 0.0
        %1594 = vmatpush2.msra.mxu0 0.0
        %1595 = vmatprep.subr.mxu0 0.0
        %1596 = vmatpush2.msra.mxu0 0.0
        %1597 = vmatprep.subr.mxu0 0.0
        %1598 = vmatpush2.msra.mxu0 0.0
        %1599 = vmatprep.subr.mxu0 0.0
        %1600 = vmatpush2.msra.mxu0 0.0
        %1601 = vmatprep.subr.mxu0 0.0
        %1602 = vmatpush2.msra.mxu0 0.0
        %1603 = vmatprep.subr.mxu0 0.0
        %1604 = vmatpush2.msra.mxu0 0.0
        %1605 = vmatprep.subr.mxu0 0.0
        %1606 = vmatpush2.msra.mxu0 0.0
        %1607 = vmatprep.subr.mxu0 0.0
        %1608 = vmatpush2.msra.mxu0 0.0
        %1609 = vmatprep.subr.mxu0 0.0
        %1610 = vmatpush2.msra.mxu0 0.0
        %1611 = vmatprep.subr.mxu0 0.0
        %1612 = vmatpush2.msra.mxu0 0.0
        %1613 = vmatprep.subr.mxu0 0.0
        %1614 = vmatpush2.msra.mxu0 0.0
        %1615 = vmatprep.subr.mxu0 0.0
        %1616 = vmatpush2.msra.mxu0 0.0
        %1617 = vmatprep.subr.mxu0 0.0
        %1618 = vmatpush2.msra.mxu0 0.0
        %1619 = vmatprep.subr.mxu0 0.0
        %1620 = vmatpush2.msra.mxu0 0.0
        %1621 = vmatprep.mubr.f32.mxu0 0.0
        %1622 = vmatmul.mubr.f32.gmra.mxu0 %v1555
        %v1623 = vpop.f32.mrf.mxu0
        %v1624 = vadd.f32 0.0, %v1623
        %v1625 = vpop.f32.mrf.mxu0
        %1626 = vdwg.mxu0
        %v1627 = vrcp.pop %v1325
        %v1628 = vrcp.pop %v1328
        %v1629 = vrcp.pop %v1331
        %v1630 = vrcp.pop %v1334
        %v1631 = vmul.f32 %v1405, %v1627
        %v1632 = vmul.f32 %v1478, %v1628
        %v1633 = vmul.f32 %v1551, %v1629
        %v1634 = vmul.f32 %v1624, %v1630
        %v1635 = vcombine.low %v1631, %v1633
        %v1636 = vcombine.high %v1631, %v1633
        %v1638 = vunpack.c.l.s4 1983009808
        %v1639 = vunpack.c.0.s8 %v1638
        %v1640 = vlaneseq
        %v1641 = vshrl.u32 %v1640, 7
        %v1642 = vsub.s32 %v1639, %v1641
        %v1643 = vrot.slane %v1635, %v1642
        %v1645 = vunpack.c.l.s4 1983009808
        %v1646 = vunpack.c.0.s8 %v1645
        %v1647 = vlaneseq
        %v1648 = vshrl.u32 %v1647, 7
        %v1649 = vsub.s32 %v1646, %v1648
        %v1650 = vrot.slane %v1636, %v1649
        %v1651 = vcombine.low %v1632, %v1634
        %v1652 = vcombine.high %v1632, %v1634
        %v1654 = vunpack.c.l.s4 1983009808
        %v1655 = vunpack.c.0.s8 %v1654
        %v1656 = vlaneseq
        %v1657 = vshrl.u32 %v1656, 7
        %v1658 = vsub.s32 %v1655, %v1657
        %v1659 = vrot.slane %v1651, %v1658
        %v1661 = vunpack.c.l.s4 1983009808
        %v1662 = vunpack.c.0.s8 %v1661
        %v1663 = vlaneseq
        %v1664 = vshrl.u32 %v1663, 7
        %v1665 = vsub.s32 %v1662, %v1664
        %v1666 = vrot.slane %v1652, %v1665
        %v1667 = vcombine.low %v1643, %v1659
        %v1668 = vcombine.high %v1643, %v1659
        %v1670 = vunpack.c.l.s4 1934713408
        %v1671 = vunpack.c.0.s8 %v1670
        %v1672 = vlaneseq
        %v1673 = vshrl.u32 %v1672, 7
        %v1674 = vsub.s32 %v1671, %v1673
        %v1675 = vrot.slane %v1667, %v1674
        %v1677 = vunpack.c.l.s4 1934713408
        %v1678 = vunpack.c.0.s8 %v1677
        %v1679 = vlaneseq
        %v1680 = vshrl.u32 %v1679, 7
        %v1681 = vsub.s32 %v1678, %v1680
        %v1682 = vrot.slane %v1668, %v1681
        %v1683 = vcombine.low %v1650, %v1666
        %v1684 = vcombine.high %v1650, %v1666
        %v1686 = vunpack.c.l.s4 1934713408
        %v1687 = vunpack.c.0.s8 %v1686
        %v1688 = vlaneseq
        %v1689 = vshrl.u32 %v1688, 7
        %v1690 = vsub.s32 %v1687, %v1689
        %v1691 = vrot.slane %v1683, %v1690
        %v1693 = vunpack.c.l.s4 1934713408
        %v1694 = vunpack.c.0.s8 %v1693
        %v1695 = vlaneseq
        %v1696 = vshrl.u32 %v1695, 7
        %v1697 = vsub.s32 %v1694, %v1696
        %v1698 = vrot.slane %v1684, %v1697
        %v1699 = vcombine.high %v1675, 0.0
        %v1700 = vcombine.high %v1682, 0.0
        %v1701 = vcombine.high %v1691, 0.0
        %v1702 = vcombine.high %v1698, 0.0
        %v1703 = vcombine.low %v1675, %v1682
        %v1705 = vunpack.c.l.s4 1983009808
        %v1706 = vunpack.c.0.s8 %v1705
        %v1707 = vlaneseq
        %v1708 = vshrl.u32 %v1707, 7
        %v1709 = vsub.s32 %v1706, %v1708
        %v1710 = vrot.slane %v1703, %v1709
        %v1711 = vcombine.low %v1699, %v1700
        %v1713 = vunpack.c.l.s4 1983009808
        %v1714 = vunpack.c.0.s8 %v1713
        %v1715 = vlaneseq
        %v1716 = vshrl.u32 %v1715, 7
        %v1717 = vsub.s32 %v1714, %v1716
        %v1718 = vrot.slane %v1711, %v1717
        %v1719 = vcombine.low %v1691, %v1698
        %v1721 = vunpack.c.l.s4 1983009808
        %v1722 = vunpack.c.0.s8 %v1721
        %v1723 = vlaneseq
        %v1724 = vshrl.u32 %v1723, 7
        %v1725 = vsub.s32 %v1722, %v1724
        %v1726 = vrot.slane %v1719, %v1725
        %v1727 = vcombine.low %v1701, %v1702
        %v1729 = vunpack.c.l.s4 1983009808
        %v1730 = vunpack.c.0.s8 %v1729
        %v1731 = vlaneseq
        %v1732 = vshrl.u32 %v1731, 7
        %v1733 = vsub.s32 %v1730, %v1732
        %v1734 = vrot.slane %v1727, %v1733
        %v1735 = vcombine.low %v1710, %v1718
        %v1736 = vcombine.high %v1710, %v1718
        %v1738 = vunpack.c.l.s4 1934713408
        %v1739 = vunpack.c.0.s8 %v1738
        %v1740 = vlaneseq
        %v1741 = vshrl.u32 %v1740, 7
        %v1742 = vsub.s32 %v1739, %v1741
        %v1743 = vrot.slane %v1735, %v1742
        %v1745 = vunpack.c.l.s4 1934713408
        %v1746 = vunpack.c.0.s8 %v1745
        %v1747 = vlaneseq
        %v1748 = vshrl.u32 %v1747, 7
        %v1749 = vsub.s32 %v1746, %v1748
        %v1750 = vrot.slane %v1736, %v1749
        %v1751 = vcombine.low %v1726, %v1734
        %v1752 = vcombine.high %v1726, %v1734
        %v1754 = vunpack.c.l.s4 1934713408
        %v1755 = vunpack.c.0.s8 %v1754
        %v1756 = vlaneseq
        %v1757 = vshrl.u32 %v1756, 7
        %v1758 = vsub.s32 %v1755, %v1757
        %v1759 = vrot.slane %v1751, %v1758
        %v1761 = vunpack.c.l.s4 1934713408
        %v1762 = vunpack.c.0.s8 %v1761
        %v1763 = vlaneseq
        %v1764 = vshrl.u32 %v1763, 7
        %v1765 = vsub.s32 %v1762, %v1764
        %v1766 = vrot.slane %v1752, %v1765
        %v1767 = vcombine.low %v1743, %v1759
        %v1768 = vcombine.high %v1743, %v1759
        %v1769 = vcombine.low %v1750, %v1766
        %v1770 = vcombine.high %v1750, %v1766
        %1772 = vrot.lane.b32.xlu0 %v1768, 8
        %v1773 = vpop.permute.xlu0 %1772
        %1776 = vrot.lane.b32.xlu0 %v1769, 16
        %v1777 = vpop.permute.xlu0 %1776
        %1780 = vrot.lane.b32.xlu0 %v1770, 24
        %v1781 = vpop.permute.xlu0 %1780
        %v1783 = vsel %vm994, %v1767, %v1773
        %vm1784 = vcmask 130048
        %v1785 = vsel %vm1784, %v1783, %v1777
        %vm1786 = vcmask 195584
        %v1787 = vsel %vm1786, %v1785, %v1781
        %v1788 = vld [vmem:[%s5] sm:$0xff]
        %v1789 = vld [vmem:[%s5 + $0x8] sm:$0xff]
        %v1790 = vld [vmem:[%s5 + $0x10] sm:$0xff]
        %v1791 = vld [vmem:[%s5 + $0x18] sm:$0xff]
        %v1792 = vld [vmem:[%s6] sm:$0x1]
        %v1794 = vlaneseq
        %v1795 = vshrl.u32 %v1794, 7
        %v1796 = vsub.s32 0, %v1795
        %v1797 = vrot.slane %v1792, %v1796
        %v1800 = vsel %vm439, %v1787, 0
        %1802 = vmatprep.subr.mxu0 0.0
        %1803 = vmatpush1.msra.mxu0 0.0
        %1804 = vmatprep.subr.mxu0 0.0
        %1805 = vmatpush1.msra.mxu0 0.0
        %1806 = vmatprep.subr.mxu0 0.0
        %1807 = vmatpush1.msra.mxu0 0.0
        %1808 = vmatprep.subr.mxu0 0.0
        %1809 = vmatpush1.msra.mxu0 0.0
        %1810 = vmatprep.subr.mxu0 0.0
        %1811 = vmatpush1.msra.mxu0 0.0
        %1812 = vmatprep.subr.mxu0 0.0
        %1813 = vmatpush1.msra.mxu0 0.0
        %1814 = vmatprep.subr.mxu0 0.0
        %1815 = vmatpush1.msra.mxu0 0.0
        %1816 = vmatprep.subr.mxu0 0.0
        %1817 = vmatpush1.msra.mxu0 0.0
        %1818 = vmatprep.subr.mxu0 0.0
        %1819 = vmatpush1.msra.mxu0 0.0
        %1820 = vmatprep.subr.mxu0 0.0
        %1821 = vmatpush1.msra.mxu0 0.0
        %1822 = vmatprep.subr.mxu0 0.0
        %1823 = vmatpush1.msra.mxu0 0.0
        %1824 = vmatprep.subr.mxu0 0.0
        %1825 = vmatpush1.msra.mxu0 0.0
        %1826 = vmatprep.subr.mxu0 0.0
        %1827 = vmatpush1.msra.mxu0 %v1791
        %1828 = vmatprep.subr.mxu0 0.0
        %1829 = vmatpush1.msra.mxu0 %v1790
        %1830 = vmatprep.subr.mxu0 0.0
        %1831 = vmatpush1.msra.mxu0 %v1789
        %1832 = vmatprep.subr.mxu0 0.0
        %1833 = vmatpush1.msra.mxu0 %v1788
        %1834 = vmatprep.subr.mxu0 0.0
        %1835 = vmatpush2.msra.mxu0 0.0
        %1836 = vmatprep.subr.mxu0 0.0
        %1837 = vmatpush2.msra.mxu0 0.0
        %1838 = vmatprep.subr.mxu0 0.0
        %1839 = vmatpush2.msra.mxu0 0.0
        %1840 = vmatprep.subr.mxu0 0.0
        %1841 = vmatpush2.msra.mxu0 0.0
        %1842 = vmatprep.subr.mxu0 0.0
        %1843 = vmatpush2.msra.mxu0 0.0
        %1844 = vmatprep.subr.mxu0 0.0
        %1845 = vmatpush2.msra.mxu0 0.0
        %1846 = vmatprep.subr.mxu0 0.0
        %1847 = vmatpush2.msra.mxu0 0.0
        %1848 = vmatprep.subr.mxu0 0.0
        %1849 = vmatpush2.msra.mxu0 0.0
        %1850 = vmatprep.subr.mxu0 0.0
        %1851 = vmatpush2.msra.mxu0 0.0
        %1852 = vmatprep.subr.mxu0 0.0
        %1853 = vmatpush2.msra.mxu0 0.0
        %1854 = vmatprep.subr.mxu0 0.0
        %1855 = vmatpush2.msra.mxu0 0.0
        %1856 = vmatprep.subr.mxu0 0.0
        %1857 = vmatpush2.msra.mxu0 0.0
        %1858 = vmatprep.subr.mxu0 0.0
        %1859 = vmatpush2.msra.mxu0 0.0
        %1860 = vmatprep.subr.mxu0 0.0
        %1861 = vmatpush2.msra.mxu0 0.0
        %1862 = vmatprep.subr.mxu0 0.0
        %1863 = vmatpush2.msra.mxu0 0.0
        %1864 = vmatprep.subr.mxu0 0.0
        %1865 = vmatpush2.msra.mxu0 0.0
        %1866 = vmatprep.mubr.f32.mxu0 0.0
        %1867 = vmatmul.mubr.f32.gmra.mxu0 %v1800
        %v1868 = vpop.f32.mrf.mxu0
        %v1869 = vadd.f32 %v1797, %v1868
        %v1870 = vpop.f32.mrf.mxu0
        %1871 = vdwg.mxu0
        %v1872 = vadd.f32 %v436, %v1869
        %v1873 = vld [vmem:[%s7] sm:$0x1]
        %v1874 = vld [vmem:[%s8] sm:$0x1]
        %v1875 = vsel %vm439, %v1872, 0.0
        %1876 = vadd.xlane.f32.xlu0 %v1875
        %v1877 = vpop.xlane.xlu0 %1876
        %v1878 = vmul.f32 %v1877, %v443
        %v1879 = vsub.f32 %v1872, %v1878
        %v1880 = vmul.f32 %v1879, %v1879
        %v1881 = vsel %vm439, %v1880, 0.0
        %1882 = vadd.xlane.f32.xlu0 %v1881
        %v1883 = vpop.xlane.xlu0 %1882
        %v1884 = vmul.f32 %v1883, %v443
        %v1885 = vadd.f32 %v1884, 1e-05
        %v1886 = vrsqrt.pop %v1885
        %v1887 = vmul.f32 %v1879, %v1886
        %v1889 = vlaneseq
        %v1890 = vshrl.u32 %v1889, 7
        %v1891 = vsub.s32 0, %v1890
        %v1892 = vrot.slane %v1873, %v1891
        %v1894 = vmul.f32 %v1887, %v1892
        %v1896 = vlaneseq
        %v1897 = vshrl.u32 %v1896, 7
        %v1898 = vsub.s32 0, %v1897
        %v1899 = vrot.slane %v1874, %v1898
        %v1901 = vadd.f32 %v1894, %v1899
        %v1902 = vld [vmem:[%s9] sm:$0xff]
        %v1903 = vld [vmem:[%s9 + $0x8] sm:$0xff]
        %v1904 = vld [vmem:[%s9 + $0x10] sm:$0xff]
        %v1905 = vld [vmem:[%s9 + $0x18] sm:$0xff]
        %v1906 = vld [vmem:[%s10] sm:$0x1]
        %v1908 = vlaneseq
        %v1909 = vshrl.u32 %v1908, 7
        %v1910 = vsub.s32 0, %v1909
        %v1911 = vrot.slane %v1906, %v1910
        %v1914 = vsel %vm439, %v1901, 0
        %1916 = vmatprep.subr.mxu0 0.0
        %1917 = vmatpush1.msra.mxu0 0.0
        %1918 = vmatprep.subr.mxu0 0.0
        %1919 = vmatpush1.msra.mxu0 0.0
        %1920 = vmatprep.subr.mxu0 0.0
        %1921 = vmatpush1.msra.mxu0 0.0
        %1922 = vmatprep.subr.mxu0 0.0
        %1923 = vmatpush1.msra.mxu0 0.0
        %1924 = vmatprep.subr.mxu0 0.0
        %1925 = vmatpush1.msra.mxu0 0.0
        %1926 = vmatprep.subr.mxu0 0.0
        %1927 = vmatpush1.msra.mxu0 0.0
        %1928 = vmatprep.subr.mxu0 0.0
        %1929 = vmatpush1.msra.mxu0 0.0
        %1930 = vmatprep.subr.mxu0 0.0
        %1931 = vmatpush1.msra.mxu0 0.0
        %1932 = vmatprep.subr.mxu0 0.0
        %1933 = vmatpush1.msra.mxu0 0.0
        %1934 = vmatprep.subr.mxu0 0.0
        %1935 = vmatpush1.msra.mxu0 0.0
        %1936 = vmatprep.subr.mxu0 0.0
        %1937 = vmatpush1.msra.mxu0 0.0
        %1938 = vmatprep.subr.mxu0 0.0
        %1939 = vmatpush1.msra.mxu0 0.0
        %1940 = vmatprep.subr.mxu0 0.0
        %1941 = vmatpush1.msra.mxu0 %v1905
        %1942 = vmatprep.subr.mxu0 0.0
        %1943 = vmatpush1.msra.mxu0 %v1904
        %1944 = vmatprep.subr.mxu0 0.0
        %1945 = vmatpush1.msra.mxu0 %v1903
        %1946 = vmatprep.subr.mxu0 0.0
        %1947 = vmatpush1.msra.mxu0 %v1902
        %1948 = vmatprep.subr.mxu0 0.0
        %1949 = vmatpush2.msra.mxu0 0.0
        %1950 = vmatprep.subr.mxu0 0.0
        %1951 = vmatpush2.msra.mxu0 0.0
        %1952 = vmatprep.subr.mxu0 0.0
        %1953 = vmatpush2.msra.mxu0 0.0
        %1954 = vmatprep.subr.mxu0 0.0
        %1955 = vmatpush2.msra.mxu0 0.0
        %1956 = vmatprep.subr.mxu0 0.0
        %1957 = vmatpush2.msra.mxu0 0.0
        %1958 = vmatprep.subr.mxu0 0.0
        %1959 = vmatpush2.msra.mxu0 0.0
        %1960 = vmatprep.subr.mxu0 0.0
        %1961 = vmatpush2.msra.mxu0 0.0
        %1962 = vmatprep.subr.mxu0 0.0
        %1963 = vmatpush2.msra.mxu0 0.0
        %1964 = vmatprep.subr.mxu0 0.0
        %1965 = vmatpush2.msra.mxu0 0.0
        %1966 = vmatprep.subr.mxu0 0.0
        %1967 = vmatpush2.msra.mxu0 0.0
        %1968 = vmatprep.subr.mxu0 0.0
        %1969 = vmatpush2.msra.mxu0 0.0
        %1970 = vmatprep.subr.mxu0 0.0
        %1971 = vmatpush2.msra.mxu0 0.0
        %1972 = vmatprep.subr.mxu0 0.0
        %1973 = vmatpush2.msra.mxu0 0.0
        %1974 = vmatprep.subr.mxu0 0.0
        %1975 = vmatpush2.msra.mxu0 0.0
        %1976 = vmatprep.subr.mxu0 0.0
        %1977 = vmatpush2.msra.mxu0 0.0
        %1978 = vmatprep.subr.mxu0 0.0
        %1979 = vmatpush2.msra.mxu0 0.0
        %1980 = vmatprep.mubr.f32.mxu0 0.0
        %1981 = vmatmul.mubr.f32.gmra.mxu0 %v1914
        %v1982 = vpop.f32.mrf.mxu0
        %v1983 = vadd.f32 %v1911, %v1982
        %v1984 = vpop.f32.mrf.mxu0
        %1985 = vdwg.mxu0
        %v1986 = vmul.f32 %v1983, 1.702
        %v1987 = vxor.u32 %v1986, 2147483648
        %v1988 = vmul.f32 %v1987, 1.442695
        %v1989 = vpow.pop %v1988
        %v1990 = vadd.f32 %v1989, 1.0
        %v1991 = vrcp.pop %v1990
        %v1992 = vmul.f32 1.0, %v1991
        %v1993 = vmul.f32 %v1983, %v1992
        %v1994 = vld [vmem:[%s11] sm:$0xff]
        %v1995 = vld [vmem:[%s11 + $0x8] sm:$0xff]
        %v1996 = vld [vmem:[%s11 + $0x10] sm:$0xff]
        %v1997 = vld [vmem:[%s11 + $0x18] sm:$0xff]
        %v1998 = vld [vmem:[%s11 + $0x20] sm:$0xff]
        %v1999 = vld [vmem:[%s11 + $0x28] sm:$0xff]
        %v2000 = vld [vmem:[%s11 + $0x30] sm:$0xff]
        %v2001 = vld [vmem:[%s11 + $0x38] sm:$0xff]
        %v2002 = vld [vmem:[%s11 + $0x40] sm:$0xff]
        %v2003 = vld [vmem:[%s11 + $0x48] sm:$0xff]
        %v2004 = vld [vmem:[%s11 + $0x50] sm:$0xff]
        %v2005 = vld [vmem:[%s11 + $0x58] sm:$0xff]
        %v2006 = vld [vmem:[%s11 + $0x60] sm:$0xff]
        %v2007 = vld [vmem:[%s11 + $0x68] sm:$0xff]
        %v2008 = vld [vmem:[%s11 + $0x70] sm:$0xff]
        %v2009 = vld [vmem:[%s11 + $0x78] sm:$0xff]
        %v2010 = vld [vmem:[%s12] sm:$0x1]
        %v2012 = vlaneseq
        %v2013 = vshrl.u32 %v2012, 7
        %v2014 = vsub.s32 0, %v2013
        %v2015 = vrot.slane %v2010, %v2014
        %2017 = vmatprep.subr.mxu0 0.0
        %2018 = vmatpush1.msra.mxu0 %v2009
        %2019 = vmatprep.subr.mxu0 0.0
        %2020 = vmatpush1.msra.mxu0 %v2008
        %2021 = vmatprep.subr.mxu0 0.0
        %2022 = vmatpush1.msra.mxu0 %v2007
        %2023 = vmatprep.subr.mxu0 0.0
        %2024 = vmatpush1.msra.mxu0 %v2006
        %2025 = vmatprep.subr.mxu0 0.0
        %2026 = vmatpush1.msra.mxu0 %v2005
        %2027 = vmatprep.subr.mxu0 0.0
        %2028 = vmatpush1.msra.mxu0 %v2004
        %2029 = vmatprep.subr.mxu0 0.0
        %2030 = vmatpush1.msra.mxu0 %v2003
        %2031 = vmatprep.subr.mxu0 0.0
        %2032 = vmatpush1.msra.mxu0 %v2002
        %2033 = vmatprep.subr.mxu0 0.0
        %2034 = vmatpush1.msra.mxu0 %v2001
        %2035 = vmatprep.subr.mxu0 0.0
        %2036 = vmatpush1.msra.mxu0 %v2000
        %2037 = vmatprep.subr.mxu0 0.0
        %2038 = vmatpush1.msra.mxu0 %v1999
        %2039 = vmatprep.subr.mxu0 0.0
        %2040 = vmatpush1.msra.mxu0 %v1998
        %2041 = vmatprep.subr.mxu0 0.0
        %2042 = vmatpush1.msra.mxu0 %v1997
        %2043 = vmatprep.subr.mxu0 0.0
        %2044 = vmatpush1.msra.mxu0 %v1996
        %2045 = vmatprep.subr.mxu0 0.0
        %2046 = vmatpush1.msra.mxu0 %v1995
        %2047 = vmatprep.subr.mxu0 0.0
        %2048 = vmatpush1.msra.mxu0 %v1994
        %2049 = vmatprep.subr.mxu0 0.0
        %2050 = vmatpush2.msra.mxu0 0.0
        %2051 = vmatprep.subr.mxu0 0.0
        %2052 = vmatpush2.msra.mxu0 0.0
        %2053 = vmatprep.subr.mxu0 0.0
        %2054 = vmatpush2.msra.mxu0 0.0
        %2055 = vmatprep.subr.mxu0 0.0
        %2056 = vmatpush2.msra.mxu0 0.0
        %2057 = vmatprep.subr.mxu0 0.0
        %2058 = vmatpush2.msra.mxu0 0.0
        %2059 = vmatprep.subr.mxu0 0.0
        %2060 = vmatpush2.msra.mxu0 0.0
        %2061 = vmatprep.subr.mxu0 0.0
        %2062 = vmatpush2.msra.mxu0 0.0
        %2063 = vmatprep.subr.mxu0 0.0
        %2064 = vmatpush2.msra.mxu0 0.0
        %2065 = vmatprep.subr.mxu0 0.0
        %2066 = vmatpush2.msra.mxu0 0.0
        %2067 = vmatprep.subr.mxu0 0.0
        %2068 = vmatpush2.msra.mxu0 0.0
        %2069 = vmatprep.subr.mxu0 0.0
        %2070 = vmatpush2.msra.mxu0 0.0
        %2071 = vmatprep.subr.mxu0 0.0
        %2072 = vmatpush2.msra.mxu0 0.0
        %2073 = vmatprep.subr.mxu0 0.0
        %2074 = vmatpush2.msra.mxu0 0.0
        %2075 = vmatprep.subr.mxu0 0.0
        %2076 = vmatpush2.msra.mxu0 0.0
        %2077 = vmatprep.subr.mxu0 0.0
        %2078 = vmatpush2.msra.mxu0 0.0
        %2079 = vmatprep.subr.mxu0 0.0
        %2080 = vmatpush2.msra.mxu0 0.0
        %2081 = vmatprep.mubr.f32.mxu0 0.0
        %2082 = vmatmul.mubr.f32.gmra.mxu0 %v1993
        %v2083 = vpop.f32.mrf.mxu0
        %v2084 = vadd.f32 %v2015, %v2083
        %v2085 = vpop.f32.mrf.mxu0
        %2086 = vdwg.mxu0
        %v2087 = vadd.f32 %v1872, %v2084
        %2088 = vst.msk [vmem:[%s431] sm:$0xff] %vm439, %v2087
        %s2089 = sand.u32 %s313, 1
        %s2090 = scalar_lea.sflag [#allocation3], %s2089
        %s2091 = sand.u32 %s313, 1
        %s2092 = smul.addr %s2091, 8
        %s2093 = scalar_lea.vmem [#allocation2], %s2092
        // Predicated region
        $region73: #{tpu_custom_call.1} parent=71 // pred_check
          %p2094 = pneg %p323
        $region74: #{tpu_custom_call.1} parent=71 // pred_check_branch
          %2096 = sbr.rel (%p2094) target = $region76
        $region75: #{tpu_custom_call.1} parent=71 // pred_region
          %s2098 = ssub.s32 128, 128
          %2099 = vsyncadd %s2090, %s2098
          %s2100 = smul.addr %s27, 128
          %s2101 = scalar_lea.hbm %s13, %s2100
          %s2103 = sshll.u32 %s2093, 4
          %s2104 = int_to_ptr.vmem [resolvable:$true] %s2103
          %2106 = dma.vmem_to_hbm [thread:$0]  %s2104, 128, %s2101, %s2090
        $region76: #{tpu_custom_call.1} parent=71 // pred_fallthru
          _
      $region72: #{tpu_custom_call.1} parent=5 // pred_fallthru
        _
      %p2107 = scmp.le.s32.totalorder 2, %s22
      // Predicated region
      $region77: #{tpu_custom_call.1} parent=5 // pred_check
        %p2108 = pneg %p2107
      $region78: #{tpu_custom_call.1} parent=5 // pred_check_branch
        %2110 = sbr.rel (%p2108) target = $region80
      $region79: #{tpu_custom_call.1} parent=5 // pred_region
        %s2111 = ssub.s32 %s22, 2
        // Predicated region
        $region81: #{tpu_custom_call.1} parent=79 // pred_check
          %p2112 = pneg %p329
        $region82: #{tpu_custom_call.1} parent=79 // pred_check_branch
          %2114 = sbr.rel (%p2112) target = $region84
        $region83: #{tpu_custom_call.1} parent=79 // pred_region
          %s2115 = sand.u32 %s314, 1
          %s2116 = scalar_lea.sflag [#allocation3], %s2115
          %s2117 = sand.u32 %s314, 1
          %s2118 = smul.addr %s2117, 8
          %s2119 = scalar_lea.vmem [#allocation2], %s2118
          %2120 = dma.done %s2116, 128
        $region84: #{tpu_custom_call.1} parent=79 // pred_fallthru
          _
      $region80: #{tpu_custom_call.1} parent=5 // pred_fallthru
        _
    $region6: #{tpu_custom_call.1} parent=1 // loop_footer
      %s26 = sadd.s32 1, %s22
    $region7: #{tpu_custom_call.1} parent=1 // loop_footer_branch
      %21 = sbr.rel target = $region3
    $region8: #{tpu_custom_call.1} parent=1 // loop_exit
      _
    %2121 = vsyncpa [#allocation3], 1
    %s2122 = scalar_lea.sflag [#allocation3], 1
    %2123 = vsyncpa %s2122, 1

</llo_original>
